<compile_context>
chip_gen: v7x
topology: tpu7x:2x2x1
jax: 0.10.0
libtpu: 0.0.40
codegen_flags: <defaults>
</compile_context>

<pallas_src>
import functools

import jax
import jax.numpy as jnp
from jax.experimental import pallas as pl
from jax.experimental.pallas import tpu as pltpu

BN_EPS = 1e-5
_LANE = 128


def _round_up(a, b):
    return (a + b - 1) // b * b


# ---------------------------------------------------------------------------
# Kernels
# ---------------------------------------------------------------------------
def _conv_wide_T(x_ref, w_ref, *, taps, wp, s_out):
    """Accumulate KH*KW shifted (O,C)@(C,S) taps -> transposed conv (O, S) f32.

    x_ref: (1, C, S_in) bf16 flat zero-padded image (row length Wp).
    w_ref: (KH*KW, O, C) bf16 per-tap weights.
    Column s = oh*Wp + ow' of the result holds the stride-1 conv output at
    (oh, ow'); columns with ow' >= OW are "wide" garbage (cropped / masked).
    """
    acc = None
    for t, (kh, kw) in enumerate(taps):
        off = kh * wp + kw                                  # static Python int
        slab = x_ref[0, :, pl.ds(off, s_out)]               # (C, S) bf16
        part = jnp.dot(w_ref[t], slab, preferred_element_type=jnp.float32)
        acc = part if acc is None else acc + part
    return acc                                              # (O, S) f32


def _stats_kernel(x_ref, w_ref, mask_ref, stats_ref, *, taps, wp, s_out):
    """Pass 1: per-image partial per-channel sum / sum-of-squares of the conv."""
    conv = _conv_wide_T(x_ref, w_ref, taps=taps, wp=wp, s_out=s_out)
    conv = conv * mask_ref[...]            # zero out the "wide" garbage columns
    stats_ref[0, :, 0:1] = jnp.sum(conv, axis=1, keepdims=True)
    stats_ref[0, :, 1:2] = jnp.sum(conv * conv, axis=1, keepdims=True)


def _norm_kernel(x_ref, w_ref, scale_ref, shift_ref, o_ref, *, taps, wp, s_out):
    """Pass 2: conv (recomputed, tiny K) * scale + shift, then ReLU, bf16 store."""
    conv = _conv_wide_T(x_ref, w_ref, taps=taps, wp=wp, s_out=s_out)
    y = jnp.maximum(conv * scale_ref[...] + shift_ref[...], 0.0)
    o_ref[0, :, :] = y.astype(o_ref.dtype)


# ---------------------------------------------------------------------------
# Wrapper
# ---------------------------------------------------------------------------
@functools.partial(jax.jit, static_argnames=("stride", "padding"))
def unit_forward(x_nchw, weight, bias, gamma, beta, *, stride, padding):
    """Conv2d -> BatchNorm2d (training batch stats) -> ReLU. Returns NCHW f32."""
    # Conv bias is numerically irrelevant: training-mode BN subtracts the batch
    # mean, which cancels any per-channel constant exactly. (An eval-mode /
    # running-stats variant would need to re-add it.)
    del bias

    if stride != 1:
        # TODO(synk): support stride > 1 via strided per-tap slabs.
        raise NotImplementedError("Pallas Unit kernel currently implements stride=1.")

    n, c, h, w = x_nchw.shape
    o, _, kh, kw = weight.shape
    hp, wp = h + 2 * padding, w + 2 * padding
    oh, ow = hp - kh + 1, wp - kw + 1
    s_out = oh * wp                                    # "wide" conv block width
    s_in = _round_up(hp * wp + kw - 1, _LANE)          # flat image + slab overrun

    # ---- input prep: one fused pad/reshape/cast pass over the image ---------
    xp = jnp.pad(x_nchw, ((0, 0), (0, 0), (padding, padding), (padding, padding)))
    x_flat = xp.reshape(n, c, hp * wp)
    x_flat = jnp.pad(x_flat, ((0, 0), (0, 0), (0, s_in - hp * wp))).astype(jnp.bfloat16)

    taps = tuple((i, j) for i in range(kh) for j in range(kw))
    w_taps = jnp.transpose(weight, (2, 3, 0, 1)).reshape(kh * kw, o, c)
    w_taps = w_taps.astype(jnp.bfloat16)

    # Valid-column mask for the "wide" conv rows (ow' < OW), built once.
    col = jnp.arange(s_out, dtype=jnp.int32).reshape(1, s_out)
    mask = ((col % wp) < ow).astype(jnp.float32)

    cparams = pltpu.CompilerParams(
        dimension_semantics=("parallel",),
        vmem_limit_bytes=32 * 1024 * 1024,
    )

    # ----- Pass 1: per-image partial sum / sumsq (parallel over batch) -------
    stats = pl.pallas_call(
        functools.partial(_stats_kernel, taps=taps, wp=wp, s_out=s_out),
        out_shape=jax.ShapeDtypeStruct((n, o, 2), jnp.float32),
        grid=(n,),
        in_specs=[
            pl.BlockSpec((1, c, s_in), lambda b: (b, 0, 0)),
            pl.BlockSpec((kh * kw, o, c), lambda b: (0, 0, 0)),
            pl.BlockSpec((1, s_out), lambda b: (0, 0)),
        ],
        out_specs=pl.BlockSpec((1, o, 2), lambda b: (b, 0, 0)),
        compiler_params=cparams,
    )(x_flat, w_taps, mask)

    # ----- Fold BN into per-channel scale/shift (tiny O(N*O) work) -----------
    m_total = float(n * oh * ow)
    psum = jnp.sum(stats[:, :, 0], axis=0)
    psumsq = jnp.sum(stats[:, :, 1], axis=0)
    mean = psum / m_total
    var = jnp.maximum(psumsq / m_total - mean * mean, 0.0)
    inv_std = jax.lax.rsqrt(var + BN_EPS)
    scale_v = gamma.astype(jnp.float32) * inv_std
    shift_v = beta.astype(jnp.float32) - mean * scale_v
    scale = scale_v.reshape(o, 1)
    shift = shift_v.reshape(o, 1)

    # ----- Pass 2: conv (recomputed) * scale + shift, ReLU, bf16 writeback ---
    out_wide = pl.pallas_call(
        functools.partial(_norm_kernel, taps=taps, wp=wp, s_out=s_out),
        out_shape=jax.ShapeDtypeStruct((n, o, s_out), jnp.bfloat16),
        grid=(n,),
        in_specs=[
            pl.BlockSpec((1, c, s_in), lambda b: (b, 0, 0)),
            pl.BlockSpec((kh * kw, o, c), lambda b: (0, 0, 0)),
            pl.BlockSpec((o, 1), lambda b: (0, 0)),
            pl.BlockSpec((o, 1), lambda b: (0, 0)),
        ],
        out_specs=pl.BlockSpec((1, o, s_out), lambda b: (b, 0, 0)),
        compiler_params=cparams,
    )(x_flat, w_taps, scale, shift)

    # Already NCHW-ordered: (N, O, OH*Wp) -> (N, O, OH, Wp) -> crop the KW-1
    # "wide" garbage columns -> f32. No transpose, no lane-dim 16x slice.
    out = out_wide.reshape(n, o, oh, wp)[:, :, :, :ow].astype(jnp.float32)
    return out


# ---------------------------------------------------------------------------
# Pure-JAX references
# ---------------------------------------------------------------------------
def _reference(x, weight, bias, gamma, beta, *, stride, padding, matmul_dtype=None):
    xw, ww = x, weight
    if matmul_dtype is not None:
        xw = x.astype(matmul_dtype)
        ww = weight.astype(matmul_dtype)
    conv = jax.lax.conv_general_dilated(
        xw, ww,
        window_strides=(stride, stride),
        padding=[(padding, padding), (padding, padding)],
        dimension_numbers=("NCHW", "OIHW", "NCHW"),
        preferred_element_type=jnp.float32,
    ) + bias[None, :, None, None]
    mean = jnp.mean(conv, axis=(0, 2, 3), keepdims=True)
    var = jnp.mean((conv - mean) ** 2, axis=(0, 2, 3), keepdims=True)
    y = (conv - mean) * jax.lax.rsqrt(var + BN_EPS)
    y = y * gamma[None, :, None, None] + beta[None, :, None, None]
    return jnp.maximum(y, 0.0)


if __name__ == "__main__":
    # Unit(input_channels=4, output_channels=8, kernel_size=3, stride=1, padding=1)
    N, C, H, W = 2, 4, 16, 16
    O, KH, KW = 8, 3, 3
    STRIDE, PAD = 1, 1

    key = jax.random.PRNGKey(0)
    kx, kw_, kb = jax.random.split(key, 3)

    x = jax.random.normal(kx, (N, C, H, W), dtype=jnp.float32)
    fan_in = C * KH * KW
    bound = 1.0 / (fan_in ** 0.5)
    weight = jax.random.uniform(kw_, (O, C, KH, KW), jnp.float32, -bound, bound)
    bias = jax.random.uniform(kb, (O,), jnp.float32, -bound, bound)
    gamma = jnp.ones((O,), jnp.float32)   # BatchNorm2d default init
    beta = jnp.zeros((O,), jnp.float32)

    out = unit_forward(x, weight, bias, gamma, beta, stride=STRIDE, padding=PAD)
    out = jax.block_until_ready(out)
    assert out.shape == (N, O, H, W), out.shape

    # Check vs. a reference that uses the same bf16-operand / f32-accum recipe
    # (kernel additionally rounds its output store to bf16).
    ref_bf16 = _reference(x, weight, bias, gamma, beta,
                          stride=STRIDE, padding=PAD, matmul_dtype=jnp.bfloat16)
    assert jnp.allclose(out, ref_bf16, rtol=2e-2, atol=2e-2), \
        "mismatch vs bf16-consistent reference"

    # Loose sanity check vs. the exact f32 PyTorch-semantics reference.
    ref_f32 = _reference(x, weight, bias, gamma, beta,
                         stride=STRIDE, padding=PAD, matmul_dtype=None)
    assert jnp.allclose(out, ref_f32, rtol=5e-2, atol=5e-2), \
        "mismatch vs f32 reference"

    print("KERNEL_OK")
</pallas_src>

<mosaic_0001>
module attributes {stable_mosaic.version = 11 : i64} {
  func.func @_stats_kernel(%arg0: i32, %arg1: memref<1x4x384xbf16, #tpu.memory_space<vmem>>, %arg2: memref<9x8x4xbf16, #tpu.memory_space<vmem>>, %arg3: memref<1x288xf32, #tpu.memory_space<vmem>>, %arg4: memref<1x8x2xf32, #tpu.memory_space<vmem>>) attributes {dimension_semantics = [#tpu.dimension_semantics<parallel>], iteration_bounds = array<i64: 2>, scalar_prefetch = 0 : i64, scratch_operands = 0 : i64, tpu.core_type = #tpu.core_type<tc>, window_params = [{transform_indices = @transform_0, window_bounds = array<i64: 1, 4, 384>}, {pipeline_mode = #tpu.pipeline_mode<synchronous>, transform_indices = @transform_1, window_bounds = array<i64: 9, 8, 4>}, {pipeline_mode = #tpu.pipeline_mode<synchronous>, transform_indices = @transform_2, window_bounds = array<i64: 1, 288>}, {transform_indices = @transform_3, window_bounds = array<i64: 1, 8, 2>}]} {
    %c0 = arith.constant 0 : index
    %c0_0 = arith.constant 0 : index
    %c0_1 = arith.constant 0 : index
    %0 = vector.load %arg1[%c0, %c0_0, %c0_1] : memref<1x4x384xbf16, #tpu.memory_space<vmem>>, vector<1x4x288xbf16>
    %1 = vector.shape_cast %0 : vector<1x4x288xbf16> to vector<4x288xbf16>
    %c0_2 = arith.constant 0 : index
    %c0_3 = arith.constant 0 : index
    %c0_4 = arith.constant 0 : index
    %2 = vector.load %arg2[%c0_2, %c0_3, %c0_4] : memref<9x8x4xbf16, #tpu.memory_space<vmem>>, vector<1x8x4xbf16>
    %3 = vector.shape_cast %2 : vector<1x8x4xbf16> to vector<8x4xbf16>
    %cst = arith.constant dense<0.000000e+00> : vector<8x288xf32>
    %4 = tpu.matmul %3, %1, %cst {dimension_numbers = #tpu.dot_dimension_numbers<[1], [0], [0], [1], [0, 0, 1, 1], [], []>} : vector<8x4xbf16>, vector<4x288xbf16>, vector<8x288xf32> -> vector<8x288xf32>
    %c0_5 = arith.constant 0 : index
    %c0_6 = arith.constant 0 : index
    %c1 = arith.constant 1 : index
    %5 = vector.load %arg1[%c0_5, %c0_6, %c1] : memref<1x4x384xbf16, #tpu.memory_space<vmem>>, vector<1x4x288xbf16>
    %6 = vector.shape_cast %5 : vector<1x4x288xbf16> to vector<4x288xbf16>
    %c1_7 = arith.constant 1 : index
    %c0_8 = arith.constant 0 : index
    %c0_9 = arith.constant 0 : index
    %7 = vector.load %arg2[%c1_7, %c0_8, %c0_9] : memref<9x8x4xbf16, #tpu.memory_space<vmem>>, vector<1x8x4xbf16>
    %8 = vector.shape_cast %7 : vector<1x8x4xbf16> to vector<8x4xbf16>
    %cst_10 = arith.constant dense<0.000000e+00> : vector<8x288xf32>
    %9 = tpu.matmul %8, %6, %cst_10 {dimension_numbers = #tpu.dot_dimension_numbers<[1], [0], [0], [1], [0, 0, 1, 1], [], []>} : vector<8x4xbf16>, vector<4x288xbf16>, vector<8x288xf32> -> vector<8x288xf32>
    %10 = arith.addf %4, %9 : vector<8x288xf32>
    %c0_11 = arith.constant 0 : index
    %c0_12 = arith.constant 0 : index
    %c2 = arith.constant 2 : index
    %11 = vector.load %arg1[%c0_11, %c0_12, %c2] : memref<1x4x384xbf16, #tpu.memory_space<vmem>>, vector<1x4x288xbf16>
    %12 = vector.shape_cast %11 : vector<1x4x288xbf16> to vector<4x288xbf16>
    %c2_13 = arith.constant 2 : index
    %c0_14 = arith.constant 0 : index
    %c0_15 = arith.constant 0 : index
    %13 = vector.load %arg2[%c2_13, %c0_14, %c0_15] : memref<9x8x4xbf16, #tpu.memory_space<vmem>>, vector<1x8x4xbf16>
    %14 = vector.shape_cast %13 : vector<1x8x4xbf16> to vector<8x4xbf16>
    %cst_16 = arith.constant dense<0.000000e+00> : vector<8x288xf32>
    %15 = tpu.matmul %14, %12, %cst_16 {dimension_numbers = #tpu.dot_dimension_numbers<[1], [0], [0], [1], [0, 0, 1, 1], [], []>} : vector<8x4xbf16>, vector<4x288xbf16>, vector<8x288xf32> -> vector<8x288xf32>
    %16 = arith.addf %10, %15 : vector<8x288xf32>
    %c0_17 = arith.constant 0 : index
    %c0_18 = arith.constant 0 : index
    %c18 = arith.constant 18 : index
    %17 = vector.load %arg1[%c0_17, %c0_18, %c18] : memref<1x4x384xbf16, #tpu.memory_space<vmem>>, vector<1x4x288xbf16>
    %18 = vector.shape_cast %17 : vector<1x4x288xbf16> to vector<4x288xbf16>
    %c3 = arith.constant 3 : index
    %c0_19 = arith.constant 0 : index
    %c0_20 = arith.constant 0 : index
    %19 = vector.load %arg2[%c3, %c0_19, %c0_20] : memref<9x8x4xbf16, #tpu.memory_space<vmem>>, vector<1x8x4xbf16>
    %20 = vector.shape_cast %19 : vector<1x8x4xbf16> to vector<8x4xbf16>
    %cst_21 = arith.constant dense<0.000000e+00> : vector<8x288xf32>
    %21 = tpu.matmul %20, %18, %cst_21 {dimension_numbers = #tpu.dot_dimension_numbers<[1], [0], [0], [1], [0, 0, 1, 1], [], []>} : vector<8x4xbf16>, vector<4x288xbf16>, vector<8x288xf32> -> vector<8x288xf32>
    %22 = arith.addf %16, %21 : vector<8x288xf32>
    %c0_22 = arith.constant 0 : index
    %c0_23 = arith.constant 0 : index
    %c19 = arith.constant 19 : index
    %23 = vector.load %arg1[%c0_22, %c0_23, %c19] : memref<1x4x384xbf16, #tpu.memory_space<vmem>>, vector<1x4x288xbf16>
    %24 = vector.shape_cast %23 : vector<1x4x288xbf16> to vector<4x288xbf16>
    %c4 = arith.constant 4 : index
    %c0_24 = arith.constant 0 : index
    %c0_25 = arith.constant 0 : index
    %25 = vector.load %arg2[%c4, %c0_24, %c0_25] : memref<9x8x4xbf16, #tpu.memory_space<vmem>>, vector<1x8x4xbf16>
    %26 = vector.shape_cast %25 : vector<1x8x4xbf16> to vector<8x4xbf16>
    %cst_26 = arith.constant dense<0.000000e+00> : vector<8x288xf32>
    %27 = tpu.matmul %26, %24, %cst_26 {dimension_numbers = #tpu.dot_dimension_numbers<[1], [0], [0], [1], [0, 0, 1, 1], [], []>} : vector<8x4xbf16>, vector<4x288xbf16>, vector<8x288xf32> -> vector<8x288xf32>
    %28 = arith.addf %22, %27 : vector<8x288xf32>
    %c0_27 = arith.constant 0 : index
    %c0_28 = arith.constant 0 : index
    %c20 = arith.constant 20 : index
    %29 = vector.load %arg1[%c0_27, %c0_28, %c20] : memref<1x4x384xbf16, #tpu.memory_space<vmem>>, vector<1x4x288xbf16>
    %30 = vector.shape_cast %29 : vector<1x4x288xbf16> to vector<4x288xbf16>
    %c5 = arith.constant 5 : index
    %c0_29 = arith.constant 0 : index
    %c0_30 = arith.constant 0 : index
    %31 = vector.load %arg2[%c5, %c0_29, %c0_30] : memref<9x8x4xbf16, #tpu.memory_space<vmem>>, vector<1x8x4xbf16>
    %32 = vector.shape_cast %31 : vector<1x8x4xbf16> to vector<8x4xbf16>
    %cst_31 = arith.constant dense<0.000000e+00> : vector<8x288xf32>
    %33 = tpu.matmul %32, %30, %cst_31 {dimension_numbers = #tpu.dot_dimension_numbers<[1], [0], [0], [1], [0, 0, 1, 1], [], []>} : vector<8x4xbf16>, vector<4x288xbf16>, vector<8x288xf32> -> vector<8x288xf32>
    %34 = arith.addf %28, %33 : vector<8x288xf32>
    %c0_32 = arith.constant 0 : index
    %c0_33 = arith.constant 0 : index
    %c36 = arith.constant 36 : index
    %35 = vector.load %arg1[%c0_32, %c0_33, %c36] : memref<1x4x384xbf16, #tpu.memory_space<vmem>>, vector<1x4x288xbf16>
    %36 = vector.shape_cast %35 : vector<1x4x288xbf16> to vector<4x288xbf16>
    %c6 = arith.constant 6 : index
    %c0_34 = arith.constant 0 : index
    %c0_35 = arith.constant 0 : index
    %37 = vector.load %arg2[%c6, %c0_34, %c0_35] : memref<9x8x4xbf16, #tpu.memory_space<vmem>>, vector<1x8x4xbf16>
    %38 = vector.shape_cast %37 : vector<1x8x4xbf16> to vector<8x4xbf16>
    %cst_36 = arith.constant dense<0.000000e+00> : vector<8x288xf32>
    %39 = tpu.matmul %38, %36, %cst_36 {dimension_numbers = #tpu.dot_dimension_numbers<[1], [0], [0], [1], [0, 0, 1, 1], [], []>} : vector<8x4xbf16>, vector<4x288xbf16>, vector<8x288xf32> -> vector<8x288xf32>
    %40 = arith.addf %34, %39 : vector<8x288xf32>
    %c0_37 = arith.constant 0 : index
    %c0_38 = arith.constant 0 : index
    %c37 = arith.constant 37 : index
    %41 = vector.load %arg1[%c0_37, %c0_38, %c37] : memref<1x4x384xbf16, #tpu.memory_space<vmem>>, vector<1x4x288xbf16>
    %42 = vector.shape_cast %41 : vector<1x4x288xbf16> to vector<4x288xbf16>
    %c7 = arith.constant 7 : index
    %c0_39 = arith.constant 0 : index
    %c0_40 = arith.constant 0 : index
    %43 = vector.load %arg2[%c7, %c0_39, %c0_40] : memref<9x8x4xbf16, #tpu.memory_space<vmem>>, vector<1x8x4xbf16>
    %44 = vector.shape_cast %43 : vector<1x8x4xbf16> to vector<8x4xbf16>
    %cst_41 = arith.constant dense<0.000000e+00> : vector<8x288xf32>
    %45 = tpu.matmul %44, %42, %cst_41 {dimension_numbers = #tpu.dot_dimension_numbers<[1], [0], [0], [1], [0, 0, 1, 1], [], []>} : vector<8x4xbf16>, vector<4x288xbf16>, vector<8x288xf32> -> vector<8x288xf32>
    %46 = arith.addf %40, %45 : vector<8x288xf32>
    %c0_42 = arith.constant 0 : index
    %c0_43 = arith.constant 0 : index
    %c38 = arith.constant 38 : index
    %47 = vector.load %arg1[%c0_42, %c0_43, %c38] : memref<1x4x384xbf16, #tpu.memory_space<vmem>>, vector<1x4x288xbf16>
    %48 = vector.shape_cast %47 : vector<1x4x288xbf16> to vector<4x288xbf16>
    %c8 = arith.constant 8 : index
    %c0_44 = arith.constant 0 : index
    %c0_45 = arith.constant 0 : index
    %49 = vector.load %arg2[%c8, %c0_44, %c0_45] : memref<9x8x4xbf16, #tpu.memory_space<vmem>>, vector<1x8x4xbf16>
    %50 = vector.shape_cast %49 : vector<1x8x4xbf16> to vector<8x4xbf16>
    %cst_46 = arith.constant dense<0.000000e+00> : vector<8x288xf32>
    %51 = tpu.matmul %50, %48, %cst_46 {dimension_numbers = #tpu.dot_dimension_numbers<[1], [0], [0], [1], [0, 0, 1, 1], [], []>} : vector<8x4xbf16>, vector<4x288xbf16>, vector<8x288xf32> -> vector<8x288xf32>
    %52 = arith.addf %46, %51 : vector<8x288xf32>
    %c0_47 = arith.constant 0 : index
    %c0_48 = arith.constant 0 : index
    %53 = vector.load %arg3[%c0_47, %c0_48] : memref<1x288xf32, #tpu.memory_space<vmem>>, vector<1x288xf32>
    %54 = vector.broadcast %53 : vector<1x288xf32> to vector<8x288xf32>
    %55 = arith.mulf %52, %54 : vector<8x288xf32>
    %cst_49 = arith.constant dense<0.000000e+00> : vector<8xf32>
    %56 = vector.multi_reduction <add>, %55, %cst_49 [1] : vector<8x288xf32> to vector<8xf32>
    %57 = vector.shape_cast %56 : vector<8xf32> to vector<8x1xf32>
    %c0_50 = arith.constant 0 : index
    %c0_51 = arith.constant 0 : index
    %c0_52 = arith.constant 0 : index
    %58 = vector.load %arg4[%c0_50, %c0_51, %c0_52] : memref<1x8x2xf32, #tpu.memory_space<vmem>>, vector<1x8x1xf32>
    %59 = vector.shape_cast %58 : vector<1x8x1xf32> to vector<8x1xf32>
    %60 = vector.shape_cast %57 : vector<8x1xf32> to vector<1x8x1xf32>
    tpu.vector_store %arg4[%c0_50, %c0_51, %c0_52], %60 {strides = array<i32>} : memref<1x8x2xf32, #tpu.memory_space<vmem>>, vector<1x8x1xf32>,
    %61 = arith.mulf %55, %55 : vector<8x288xf32>
    %cst_53 = arith.constant dense<0.000000e+00> : vector<8xf32>
    %62 = vector.multi_reduction <add>, %61, %cst_53 [1] : vector<8x288xf32> to vector<8xf32>
    %63 = vector.shape_cast %62 : vector<8xf32> to vector<8x1xf32>
    %c0_54 = arith.constant 0 : index
    %c0_55 = arith.constant 0 : index
    %c1_56 = arith.constant 1 : index
    %64 = vector.load %arg4[%c0_54, %c0_55, %c1_56] : memref<1x8x2xf32, #tpu.memory_space<vmem>>, vector<1x8x1xf32>
    %65 = vector.shape_cast %64 : vector<1x8x1xf32> to vector<8x1xf32>
    %66 = vector.shape_cast %63 : vector<8x1xf32> to vector<1x8x1xf32>
    tpu.vector_store %arg4[%c0_54, %c0_55, %c1_56], %66 {strides = array<i32>} : memref<1x8x2xf32, #tpu.memory_space<vmem>>, vector<1x8x1xf32>,
    return
  }
  func.func @transform_0(%arg0: i32) -> (i32, i32, i32) {
    %c0_i32 = arith.constant 0 : i32
    %c0_i32_0 = arith.constant 0 : i32
    %c0_i32_1 = arith.constant 0 : i32
    return %arg0, %c0_i32, %c0_i32_0 : i32, i32, i32
  }
  func.func @transform_1(%arg0: i32) -> (i32, i32, i32) {
    %c0_i32 = arith.constant 0 : i32
    %c0_i32_0 = arith.constant 0 : i32
    %c0_i32_1 = arith.constant 0 : i32
    %c0_i32_2 = arith.constant 0 : i32
    return %c0_i32, %c0_i32_0, %c0_i32_1 : i32, i32, i32
  }
  func.func @transform_2(%arg0: i32) -> (i32, i32) {
    %c0_i32 = arith.constant 0 : i32
    %c0_i32_0 = arith.constant 0 : i32
    %c0_i32_1 = arith.constant 0 : i32
    return %c0_i32, %c0_i32_0 : i32, i32
  }
  func.func @transform_3(%arg0: i32) -> (i32, i32, i32) {
    %c0_i32 = arith.constant 0 : i32
    %c0_i32_0 = arith.constant 0 : i32
    %c0_i32_1 = arith.constant 0 : i32
    return %arg0, %c0_i32, %c0_i32_0 : i32, i32, i32
  }
}

module attributes {stable_mosaic.version = 11 : i64} {
  func.func @_norm_kernel(%arg0: i32, %arg1: memref<1x4x384xbf16, #tpu.memory_space<vmem>>, %arg2: memref<9x8x4xbf16, #tpu.memory_space<vmem>>, %arg3: memref<8x1xf32, #tpu.memory_space<vmem>>, %arg4: memref<8x1xf32, #tpu.memory_space<vmem>>, %arg5: memref<1x8x288xbf16, #tpu.memory_space<vmem>>) attributes {dimension_semantics = [#tpu.dimension_semantics<parallel>], iteration_bounds = array<i64: 2>, scalar_prefetch = 0 : i64, scratch_operands = 0 : i64, tpu.core_type = #tpu.core_type<tc>, window_params = [{transform_indices = @transform_0, window_bounds = array<i64: 1, 4, 384>}, {pipeline_mode = #tpu.pipeline_mode<synchronous>, transform_indices = @transform_1, window_bounds = array<i64: 9, 8, 4>}, {pipeline_mode = #tpu.pipeline_mode<synchronous>, transform_indices = @transform_2, window_bounds = array<i64: 8, 1>}, {pipeline_mode = #tpu.pipeline_mode<synchronous>, transform_indices = @transform_3, window_bounds = array<i64: 8, 1>}, {transform_indices = @transform_4, window_bounds = array<i64: 1, 8, 288>}]} {
    %c0 = arith.constant 0 : index
    %c0_0 = arith.constant 0 : index
    %c0_1 = arith.constant 0 : index
    %0 = vector.load %arg1[%c0, %c0_0, %c0_1] : memref<1x4x384xbf16, #tpu.memory_space<vmem>>, vector<1x4x288xbf16>
    %1 = vector.shape_cast %0 : vector<1x4x288xbf16> to vector<4x288xbf16>
    %c0_2 = arith.constant 0 : index
    %c0_3 = arith.constant 0 : index
    %c0_4 = arith.constant 0 : index
    %2 = vector.load %arg2[%c0_2, %c0_3, %c0_4] : memref<9x8x4xbf16, #tpu.memory_space<vmem>>, vector<1x8x4xbf16>
    %3 = vector.shape_cast %2 : vector<1x8x4xbf16> to vector<8x4xbf16>
    %cst = arith.constant dense<0.000000e+00> : vector<8x288xf32>
    %4 = tpu.matmul %3, %1, %cst {dimension_numbers = #tpu.dot_dimension_numbers<[1], [0], [0], [1], [0, 0, 1, 1], [], []>} : vector<8x4xbf16>, vector<4x288xbf16>, vector<8x288xf32> -> vector<8x288xf32>
    %c0_5 = arith.constant 0 : index
    %c0_6 = arith.constant 0 : index
    %c1 = arith.constant 1 : index
    %5 = vector.load %arg1[%c0_5, %c0_6, %c1] : memref<1x4x384xbf16, #tpu.memory_space<vmem>>, vector<1x4x288xbf16>
    %6 = vector.shape_cast %5 : vector<1x4x288xbf16> to vector<4x288xbf16>
    %c1_7 = arith.constant 1 : index
    %c0_8 = arith.constant 0 : index
    %c0_9 = arith.constant 0 : index
    %7 = vector.load %arg2[%c1_7, %c0_8, %c0_9] : memref<9x8x4xbf16, #tpu.memory_space<vmem>>, vector<1x8x4xbf16>
    %8 = vector.shape_cast %7 : vector<1x8x4xbf16> to vector<8x4xbf16>
    %cst_10 = arith.constant dense<0.000000e+00> : vector<8x288xf32>
    %9 = tpu.matmul %8, %6, %cst_10 {dimension_numbers = #tpu.dot_dimension_numbers<[1], [0], [0], [1], [0, 0, 1, 1], [], []>} : vector<8x4xbf16>, vector<4x288xbf16>, vector<8x288xf32> -> vector<8x288xf32>
    %10 = arith.addf %4, %9 : vector<8x288xf32>
    %c0_11 = arith.constant 0 : index
    %c0_12 = arith.constant 0 : index
    %c2 = arith.constant 2 : index
    %11 = vector.load %arg1[%c0_11, %c0_12, %c2] : memref<1x4x384xbf16, #tpu.memory_space<vmem>>, vector<1x4x288xbf16>
    %12 = vector.shape_cast %11 : vector<1x4x288xbf16> to vector<4x288xbf16>
    %c2_13 = arith.constant 2 : index
    %c0_14 = arith.constant 0 : index
    %c0_15 = arith.constant 0 : index
    %13 = vector.load %arg2[%c2_13, %c0_14, %c0_15] : memref<9x8x4xbf16, #tpu.memory_space<vmem>>, vector<1x8x4xbf16>
    %14 = vector.shape_cast %13 : vector<1x8x4xbf16> to vector<8x4xbf16>
    %cst_16 = arith.constant dense<0.000000e+00> : vector<8x288xf32>
    %15 = tpu.matmul %14, %12, %cst_16 {dimension_numbers = #tpu.dot_dimension_numbers<[1], [0], [0], [1], [0, 0, 1, 1], [], []>} : vector<8x4xbf16>, vector<4x288xbf16>, vector<8x288xf32> -> vector<8x288xf32>
    %16 = arith.addf %10, %15 : vector<8x288xf32>
    %c0_17 = arith.constant 0 : index
    %c0_18 = arith.constant 0 : index
    %c18 = arith.constant 18 : index
    %17 = vector.load %arg1[%c0_17, %c0_18, %c18] : memref<1x4x384xbf16, #tpu.memory_space<vmem>>, vector<1x4x288xbf16>
    %18 = vector.shape_cast %17 : vector<1x4x288xbf16> to vector<4x288xbf16>
    %c3 = arith.constant 3 : index
    %c0_19 = arith.constant 0 : index
    %c0_20 = arith.constant 0 : index
    %19 = vector.load %arg2[%c3, %c0_19, %c0_20] : memref<9x8x4xbf16, #tpu.memory_space<vmem>>, vector<1x8x4xbf16>
    %20 = vector.shape_cast %19 : vector<1x8x4xbf16> to vector<8x4xbf16>
    %cst_21 = arith.constant dense<0.000000e+00> : vector<8x288xf32>
    %21 = tpu.matmul %20, %18, %cst_21 {dimension_numbers = #tpu.dot_dimension_numbers<[1], [0], [0], [1], [0, 0, 1, 1], [], []>} : vector<8x4xbf16>, vector<4x288xbf16>, vector<8x288xf32> -> vector<8x288xf32>
    %22 = arith.addf %16, %21 : vector<8x288xf32>
    %c0_22 = arith.constant 0 : index
    %c0_23 = arith.constant 0 : index
    %c19 = arith.constant 19 : index
    %23 = vector.load %arg1[%c0_22, %c0_23, %c19] : memref<1x4x384xbf16, #tpu.memory_space<vmem>>, vector<1x4x288xbf16>
    %24 = vector.shape_cast %23 : vector<1x4x288xbf16> to vector<4x288xbf16>
    %c4 = arith.constant 4 : index
    %c0_24 = arith.constant 0 : index
    %c0_25 = arith.constant 0 : index
    %25 = vector.load %arg2[%c4, %c0_24, %c0_25] : memref<9x8x4xbf16, #tpu.memory_space<vmem>>, vector<1x8x4xbf16>
    %26 = vector.shape_cast %25 : vector<1x8x4xbf16> to vector<8x4xbf16>
    %cst_26 = arith.constant dense<0.000000e+00> : vector<8x288xf32>
    %27 = tpu.matmul %26, %24, %cst_26 {dimension_numbers = #tpu.dot_dimension_numbers<[1], [0], [0], [1], [0, 0, 1, 1], [], []>} : vector<8x4xbf16>, vector<4x288xbf16>, vector<8x288xf32> -> vector<8x288xf32>
    %28 = arith.addf %22, %27 : vector<8x288xf32>
    %c0_27 = arith.constant 0 : index
    %c0_28 = arith.constant 0 : index
    %c20 = arith.constant 20 : index
    %29 = vector.load %arg1[%c0_27, %c0_28, %c20] : memref<1x4x384xbf16, #tpu.memory_space<vmem>>, vector<1x4x288xbf16>
    %30 = vector.shape_cast %29 : vector<1x4x288xbf16> to vector<4x288xbf16>
    %c5 = arith.constant 5 : index
    %c0_29 = arith.constant 0 : index
    %c0_30 = arith.constant 0 : index
    %31 = vector.load %arg2[%c5, %c0_29, %c0_30] : memref<9x8x4xbf16, #tpu.memory_space<vmem>>, vector<1x8x4xbf16>
    %32 = vector.shape_cast %31 : vector<1x8x4xbf16> to vector<8x4xbf16>
    %cst_31 = arith.constant dense<0.000000e+00> : vector<8x288xf32>
    %33 = tpu.matmul %32, %30, %cst_31 {dimension_numbers = #tpu.dot_dimension_numbers<[1], [0], [0], [1], [0, 0, 1, 1], [], []>} : vector<8x4xbf16>, vector<4x288xbf16>, vector<8x288xf32> -> vector<8x288xf32>
    %34 = arith.addf %28, %33 : vector<8x288xf32>
    %c0_32 = arith.constant 0 : index
    %c0_33 = arith.constant 0 : index
    %c36 = arith.constant 36 : index
    %35 = vector.load %arg1[%c0_32, %c0_33, %c36] : memref<1x4x384xbf16, #tpu.memory_space<vmem>>, vector<1x4x288xbf16>
    %36 = vector.shape_cast %35 : vector<1x4x288xbf16> to vector<4x288xbf16>
    %c6 = arith.constant 6 : index
    %c0_34 = arith.constant 0 : index
    %c0_35 = arith.constant 0 : index
    %37 = vector.load %arg2[%c6, %c0_34, %c0_35] : memref<9x8x4xbf16, #tpu.memory_space<vmem>>, vector<1x8x4xbf16>
    %38 = vector.shape_cast %37 : vector<1x8x4xbf16> to vector<8x4xbf16>
    %cst_36 = arith.constant dense<0.000000e+00> : vector<8x288xf32>
    %39 = tpu.matmul %38, %36, %cst_36 {dimension_numbers = #tpu.dot_dimension_numbers<[1], [0], [0], [1], [0, 0, 1, 1], [], []>} : vector<8x4xbf16>, vector<4x288xbf16>, vector<8x288xf32> -> vector<8x288xf32>
    %40 = arith.addf %34, %39 : vector<8x288xf32>
    %c0_37 = arith.constant 0 : index
    %c0_38 = arith.constant 0 : index
    %c37 = arith.constant 37 : index
    %41 = vector.load %arg1[%c0_37, %c0_38, %c37] : memref<1x4x384xbf16, #tpu.memory_space<vmem>>, vector<1x4x288xbf16>
    %42 = vector.shape_cast %41 : vector<1x4x288xbf16> to vector<4x288xbf16>
    %c7 = arith.constant 7 : index
    %c0_39 = arith.constant 0 : index
    %c0_40 = arith.constant 0 : index
    %43 = vector.load %arg2[%c7, %c0_39, %c0_40] : memref<9x8x4xbf16, #tpu.memory_space<vmem>>, vector<1x8x4xbf16>
    %44 = vector.shape_cast %43 : vector<1x8x4xbf16> to vector<8x4xbf16>
    %cst_41 = arith.constant dense<0.000000e+00> : vector<8x288xf32>
    %45 = tpu.matmul %44, %42, %cst_41 {dimension_numbers = #tpu.dot_dimension_numbers<[1], [0], [0], [1], [0, 0, 1, 1], [], []>} : vector<8x4xbf16>, vector<4x288xbf16>, vector<8x288xf32> -> vector<8x288xf32>
    %46 = arith.addf %40, %45 : vector<8x288xf32>
    %c0_42 = arith.constant 0 : index
    %c0_43 = arith.constant 0 : index
    %c38 = arith.constant 38 : index
    %47 = vector.load %arg1[%c0_42, %c0_43, %c38] : memref<1x4x384xbf16, #tpu.memory_space<vmem>>, vector<1x4x288xbf16>
    %48 = vector.shape_cast %47 : vector<1x4x288xbf16> to vector<4x288xbf16>
    %c8 = arith.constant 8 : index
    %c0_44 = arith.constant 0 : index
    %c0_45 = arith.constant 0 : index
    %49 = vector.load %arg2[%c8, %c0_44, %c0_45] : memref<9x8x4xbf16, #tpu.memory_space<vmem>>, vector<1x8x4xbf16>
    %50 = vector.shape_cast %49 : vector<1x8x4xbf16> to vector<8x4xbf16>
    %cst_46 = arith.constant dense<0.000000e+00> : vector<8x288xf32>
    %51 = tpu.matmul %50, %48, %cst_46 {dimension_numbers = #tpu.dot_dimension_numbers<[1], [0], [0], [1], [0, 0, 1, 1], [], []>} : vector<8x4xbf16>, vector<4x288xbf16>, vector<8x288xf32> -> vector<8x288xf32>
    %52 = arith.addf %46, %51 : vector<8x288xf32>
    %c0_47 = arith.constant 0 : index
    %c0_48 = arith.constant 0 : index
    %53 = vector.load %arg3[%c0_47, %c0_48] : memref<8x1xf32, #tpu.memory_space<vmem>>, vector<8x1xf32>
    %54 = vector.broadcast %53 : vector<8x1xf32> to vector<8x288xf32>
    %55 = arith.mulf %52, %54 : vector<8x288xf32>
    %c0_49 = arith.constant 0 : index
    %c0_50 = arith.constant 0 : index
    %56 = vector.load %arg4[%c0_49, %c0_50] : memref<8x1xf32, #tpu.memory_space<vmem>>, vector<8x1xf32>
    %57 = vector.broadcast %56 : vector<8x1xf32> to vector<8x288xf32>
    %58 = arith.addf %55, %57 : vector<8x288xf32>
    %cst_51 = arith.constant 0.000000e+00 : f32
    %59 = vector.broadcast %cst_51 : f32 to vector<8x288xf32>
    %60 = arith.maximumf %58, %59 : vector<8x288xf32>
    %61 = arith.truncf %60 : vector<8x288xf32> to vector<8x288xbf16>
    %c0_52 = arith.constant 0 : index
    %c0_53 = arith.constant 0 : index
    %c0_54 = arith.constant 0 : index
    %62 = vector.load %arg5[%c0_52, %c0_53, %c0_54] : memref<1x8x288xbf16, #tpu.memory_space<vmem>>, vector<1x8x288xbf16>
    %63 = vector.shape_cast %62 : vector<1x8x288xbf16> to vector<8x288xbf16>
    %64 = vector.shape_cast %61 : vector<8x288xbf16> to vector<1x8x288xbf16>
    tpu.vector_store %arg5[%c0_52, %c0_53, %c0_54], %64 {strides = array<i32>} : memref<1x8x288xbf16, #tpu.memory_space<vmem>>, vector<1x8x288xbf16>,
    return
  }
  func.func @transform_0(%arg0: i32) -> (i32, i32, i32) {
    %c0_i32 = arith.constant 0 : i32
    %c0_i32_0 = arith.constant 0 : i32
    %c0_i32_1 = arith.constant 0 : i32
    return %arg0, %c0_i32, %c0_i32_0 : i32, i32, i32
  }
  func.func @transform_1(%arg0: i32) -> (i32, i32, i32) {
    %c0_i32 = arith.constant 0 : i32
    %c0_i32_0 = arith.constant 0 : i32
    %c0_i32_1 = arith.constant 0 : i32
    %c0_i32_2 = arith.constant 0 : i32
    return %c0_i32, %c0_i32_0, %c0_i32_1 : i32, i32, i32
  }
  func.func @transform_2(%arg0: i32) -> (i32, i32) {
    %c0_i32 = arith.constant 0 : i32
    %c0_i32_0 = arith.constant 0 : i32
    %c0_i32_1 = arith.constant 0 : i32
    return %c0_i32, %c0_i32_0 : i32, i32
  }
  func.func @transform_3(%arg0: i32) -> (i32, i32) {
    %c0_i32 = arith.constant 0 : i32
    %c0_i32_0 = arith.constant 0 : i32
    %c0_i32_1 = arith.constant 0 : i32
    return %c0_i32, %c0_i32_0 : i32, i32
  }
  func.func @transform_4(%arg0: i32) -> (i32, i32, i32) {
    %c0_i32 = arith.constant 0 : i32
    %c0_i32_0 = arith.constant 0 : i32
    %c0_i32_1 = arith.constant 0 : i32
    return %arg0, %c0_i32, %c0_i32_0 : i32, i32, i32
  }
}

</mosaic_0001>

<llo_original>
// kernel: unit_forward.3
$region0: #{unit_forward.3}
  #allocation0 [shape = 'u32[]', space=smem, size = 0x4, offset = 0x4, fixed_abs, tag = 'smem constant byte address 0x4 - core index']
  #allocation1 [shape = 'u32[144,128]{1,0:T(1,128)}', space=vmem, size = 0x12000, scoped, tag = 'internal scratch']
  %s0 = inlined_call_operand.vmem [shape: bf16[2,4,384], index: 0, kind: input, shape index: {}]
  %s1 = inlined_call_operand.vmem [shape: bf16[9,8,4], index: 1, kind: input, shape index: {}]
  %s2 = inlined_call_operand.vmem [shape: f32[8,1], index: 2, kind: input, shape index: {}]
  %s3 = inlined_call_operand.vmem [shape: f32[8,1], index: 3, kind: input, shape index: {}]
  %s4 = inlined_call_operand.vmem [shape: bf16[2,8,288], index: 4, kind: output, shape index: {}]
  %s5 = sld [smem:[#allocation0]]
  $region49: #{unit_forward.3} parent=0
    _
  %s7 = ssub.s32 1, %s5
  %s8 = scalar_select 0, %s7, %s5
  loop: start=0, step=1, limit=4
  $region2: #{unit_forward.3} parent=0 // loop_pre_header
    _
  $region3: #{unit_forward.3} parent=0 // loop_header
    %s10 = sphi 0, %s14
    %p11 = scmp.ge.s32.totalorder %s10, 4
    %s20 = sphi 0, %s22
    %s23 = sphi 0, %s20
    %s24 = sphi 0, %s23
    %s40 = sphi 0, %s24
    %s44 = sphi 0, %s44
    %s46 = sphi 0, %s44
    %s47 = sphi 0, %s46
    %s61 = sphi 0, %s47
    %s65 = sphi 0, %s65
    %s67 = sphi 0, %s65
    %s68 = sphi 0, %s67
    %s82 = sphi 0, %s68
    %s86 = sphi 0, %s86
    %s88 = sphi 0, %s86
    %s89 = sphi 0, %s88
    %s103 = sphi 0, %s89
    %s109 = sphi 0, %s111
    %s112 = sphi 0, %s109
    %s113 = sphi 0, %s112
    %s129 = sphi 0, %s113
  $region4: #{unit_forward.3} parent=0 // loop_header_branch
    %13 = sbr.rel (%p11) target = $region8
  $region5: #{unit_forward.3} parent=0 // loop_body
    %s15 = ssub.s32 %s10, 1
    %s16 = ssub.s32 %s10, 2
    %s17 = sadd.s32 %s10, 1
    %s18 = ssub.s32 %s10, %s17
    %p19 = scmp.eq.s32.totalorder %s18, 0
    %s21 = sadd.s32 %s20, 1
    %s22 = scalar_select %p19, %s20, %s21
    %p25 = pneg %p19
    %p26 = scmp.eq.s32.totalorder %s10, 1
    %p27 = por %p25, %p26
    %p28 = scmp.ne.s32.totalorder %s20, %s23
    %p29 = scmp.eq.s32.totalorder %s10, 0
    %p30 = por %p28, %p29
    %p31 = scmp.ne.s32.totalorder %s20, %s23
    %p32 = scmp.eq.s32.totalorder %s15, 1
    %p33 = por %p31, %p32
    %p34 = scmp.ne.s32.totalorder %s23, %s24
    %p35 = scmp.eq.s32.totalorder %s15, 0
    %p36 = por %p34, %p35
    %p37 = scmp.ne.s32.totalorder %s23, %s24
    %p38 = scmp.eq.s32.totalorder %s16, 1
    %p39 = por %p37, %p38
    %p41 = scmp.ne.s32.totalorder %s24, %s40
    %p42 = scmp.eq.s32.totalorder %s16, 0
    %p43 = por %p41, %p42
    %s45 = sadd.s32 %s44, 1
    %p48 = scmp.eq.s32.totalorder %s10, 1
    %p49 = scmp.ne.s32.totalorder %s44, %s46
    %p50 = scmp.eq.s32.totalorder %s10, 0
    %p51 = por %p49, %p50
    %p52 = scmp.ne.s32.totalorder %s44, %s46
    %p53 = scmp.eq.s32.totalorder %s15, 1
    %p54 = por %p52, %p53
    %p55 = scmp.ne.s32.totalorder %s46, %s47
    %p56 = scmp.eq.s32.totalorder %s15, 0
    %p57 = por %p55, %p56
    %p58 = scmp.ne.s32.totalorder %s46, %s47
    %p59 = scmp.eq.s32.totalorder %s16, 1
    %p60 = por %p58, %p59
    %p62 = scmp.ne.s32.totalorder %s47, %s61
    %p63 = scmp.eq.s32.totalorder %s16, 0
    %p64 = por %p62, %p63
    %s66 = sadd.s32 %s65, 1
    %p69 = scmp.eq.s32.totalorder %s10, 1
    %p70 = scmp.ne.s32.totalorder %s65, %s67
    %p71 = scmp.eq.s32.totalorder %s10, 0
    %p72 = por %p70, %p71
    %p73 = scmp.ne.s32.totalorder %s65, %s67
    %p74 = scmp.eq.s32.totalorder %s15, 1
    %p75 = por %p73, %p74
    %p76 = scmp.ne.s32.totalorder %s67, %s68
    %p77 = scmp.eq.s32.totalorder %s15, 0
    %p78 = por %p76, %p77
    %p79 = scmp.ne.s32.totalorder %s67, %s68
    %p80 = scmp.eq.s32.totalorder %s16, 1
    %p81 = por %p79, %p80
    %p83 = scmp.ne.s32.totalorder %s68, %s82
    %p84 = scmp.eq.s32.totalorder %s16, 0
    %p85 = por %p83, %p84
    %s87 = sadd.s32 %s86, 1
    %p90 = scmp.eq.s32.totalorder %s10, 1
    %p91 = scmp.ne.s32.totalorder %s86, %s88
    %p92 = scmp.eq.s32.totalorder %s10, 0
    %p93 = por %p91, %p92
    %p94 = scmp.ne.s32.totalorder %s86, %s88
    %p95 = scmp.eq.s32.totalorder %s15, 1
    %p96 = por %p94, %p95
    %p97 = scmp.ne.s32.totalorder %s88, %s89
    %p98 = scmp.eq.s32.totalorder %s15, 0
    %p99 = por %p97, %p98
    %p100 = scmp.ne.s32.totalorder %s88, %s89
    %p101 = scmp.eq.s32.totalorder %s16, 1
    %p102 = por %p100, %p101
    %p104 = scmp.ne.s32.totalorder %s89, %s103
    %p105 = scmp.eq.s32.totalorder %s16, 0
    %p106 = por %p104, %p105
    %s107 = ssub.s32 %s10, %s17
    %p108 = scmp.eq.s32.totalorder %s107, 0
    %s110 = sadd.s32 %s109, 1
    %s111 = scalar_select %p108, %s109, %s110
    %p114 = pneg %p108
    %p115 = scmp.eq.s32.totalorder %s10, 1
    %p116 = por %p114, %p115
    %p117 = scmp.ne.s32.totalorder %s109, %s112
    %p118 = scmp.eq.s32.totalorder %s10, 0
    %p119 = por %p117, %p118
    %p120 = scmp.ne.s32.totalorder %s109, %s112
    %p121 = scmp.eq.s32.totalorder %s15, 1
    %p122 = por %p120, %p121
    %p123 = scmp.ne.s32.totalorder %s112, %s113
    %p124 = scmp.eq.s32.totalorder %s15, 0
    %p125 = por %p123, %p124
    %p126 = scmp.ne.s32.totalorder %s112, %s113
    %p127 = scmp.eq.s32.totalorder %s16, 1
    %p128 = por %p126, %p127
    %p130 = scmp.ne.s32.totalorder %s113, %s129
    %p131 = scmp.eq.s32.totalorder %s16, 0
    %p132 = por %p130, %p131
    %p133 = scmp.le.s32.totalorder 1, %s10
    %p134 = scmp.lt.s32.totalorder %s10, 3
    %p135 = pnand %p133, %p134
    %p136 = pneg %p135
    // Predicated region
    $region9: #{unit_forward.3} parent=5 // pred_check
      _
    $region10: #{unit_forward.3} parent=5 // pred_check_branch
      %138 = sbr.rel (%p135) target = $region12
    $region11: #{unit_forward.3} parent=5 // pred_region
      %s139 = ssub.s32 %s10, 1
      // Predicated region
      $region13: #{unit_forward.3} parent=11 // pred_check
        %p140 = pneg %p57
      $region14: #{unit_forward.3} parent=11 // pred_check_branch
        %142 = sbr.rel (%p140) target = $region16
      $region15: #{unit_forward.3} parent=11 // pred_region
        _
      $region16: #{unit_forward.3} parent=11 // pred_fallthru
        _
      // Predicated region
      $region17: #{unit_forward.3} parent=11 // pred_check
        %p143 = pneg %p78
      $region18: #{unit_forward.3} parent=11 // pred_check_branch
        %145 = sbr.rel (%p143) target = $region20
      $region19: #{unit_forward.3} parent=11 // pred_region
        _
      $region20: #{unit_forward.3} parent=11 // pred_fallthru
        _
      // Predicated region
      $region21: #{unit_forward.3} parent=11 // pred_check
        %p146 = pneg %p99
      $region22: #{unit_forward.3} parent=11 // pred_check_branch
        %148 = sbr.rel (%p146) target = $region24
      $region23: #{unit_forward.3} parent=11 // pred_region
        _
      $region24: #{unit_forward.3} parent=11 // pred_fallthru
        _
    $region12: #{unit_forward.3} parent=5 // pred_fallthru
      _
    %p149 = scmp.lt.s32.totalorder %s10, 2
    // Predicated region
    $region25: #{unit_forward.3} parent=5 // pred_check
      %p150 = pneg %p149
    $region26: #{unit_forward.3} parent=5 // pred_check_branch
      %152 = sbr.rel (%p150) target = $region28
    $region27: #{unit_forward.3} parent=5 // pred_region
      // Predicated region
      $region29: #{unit_forward.3} parent=27 // pred_check
        %p153 = pneg %p30
      $region30: #{unit_forward.3} parent=27 // pred_check_branch
        %155 = sbr.rel (%p153) target = $region32
      $region31: #{unit_forward.3} parent=27 // pred_region
        %p156 = scmp.lt.s32.totalorder %s10, 1
        %s157 = scalar_select %p156, %s10, 1
        %s158 = smul.addr %s157, 3
        %s159 = smul.addr %s158, 2
        %s160 = scalar_lea.vmem %s0, %s159
      $region32: #{unit_forward.3} parent=27 // pred_fallthru
        _
    $region28: #{unit_forward.3} parent=5 // pred_fallthru
      _
    %p161 = scmp.le.s32.totalorder 1, %s10
    %p162 = scmp.lt.s32.totalorder %s10, 3
    %p163 = pnand %p161, %p162
    %p164 = pneg %p163
    // Predicated region
    $region33: #{unit_forward.3} parent=5 // pred_check
      _
    $region34: #{unit_forward.3} parent=5 // pred_check_branch
      %166 = sbr.rel (%p163) target = $region36
    $region35: #{unit_forward.3} parent=5 // pred_region
      %s167 = ssub.s32 %s10, 1
      %p168 = scmp.lt.s32.totalorder %s15, 1
      %s169 = scalar_select %p168, %s15, 1
      %s170 = smul.addr %s169, 3
      %s171 = smul.addr %s170, 2
      %s172 = scalar_lea.vmem %s0, %s171
      %p173 = pneg %p36
      %p174 = pneg %p33
      %p175 = pneg %p57
      %p176 = pneg %p54
      %p177 = pneg %p78
      %p178 = pneg %p75
      %p179 = pneg %p99
      %p180 = pneg %p96
      %p181 = pneg %p125
      %p182 = pneg %p122
      %p183 = scmp.lt.s32.totalorder %s15, 1
      %s184 = scalar_select %p183, %s15, 1
      %s185 = smul.addr %s184, 3
      %s186 = smul.addr %s185, 4
      %s187 = scalar_lea.vmem %s4, %s186
      %p188 = scmp.lt.s32.totalorder %s15, 1
      %s189 = scalar_select %p188, %s15, 1
      %s190 = smul.addr %s189, 3
      %s191 = smul.addr %s190, 2
      %s192 = scalar_lea.vmem %s0, %s191
      %p193 = scmp.lt.s32.totalorder %s15, 1
      %s194 = scalar_select %p193, %s15, 1
      %s195 = smul.addr %s194, 3
      %s196 = smul.addr %s195, 4
      %s197 = scalar_lea.vmem %s4, %s196
      %v199 = vld [vmem:[%s192] sm:$0x3f]
      %v200 = vld [vmem:[%s1] sm:$0xf]
      %s201 = scalar_lea.vmem %s1, 4
      %v202 = vld [vmem:[%s201] sm:$0xf]
      %v204 = vcombine.high %v199, %v199
      %v206 = vunpack.c.l.s4 1983009808
      %v207 = vunpack.c.0.s8 %v206
      %v208 = vlaneseq
      %v209 = vshrl.u32 %v208, 7
      %v210 = vsub.s32 %v207, %v209
      %v211 = vrot.slane %v199, %v210
      %v213 = vunpack.c.l.s4 1983009808
      %v214 = vunpack.c.0.s8 %v213
      %v215 = vlaneseq
      %v216 = vshrl.u32 %v215, 7
      %v217 = vsub.s32 %v214, %v216
      %v218 = vrot.slane %v204, %v217
      %v219 = vcombine.high %v211, %v211
      %220 = vrot.lane.b32.xlu0 %v211, 127
      %v221 = vpop.permute.xlu0 %220
      %222 = vrot.lane.b32.xlu0 %v219, 127
      %v223 = vpop.permute.xlu0 %222
      %224 = vrot.lane.b32.xlu0 %v218, 127
      %v225 = vpop.permute.xlu0 %224
      %vm226 = vcmask 1039360
      %v227 = vsel %vm226, %v221, %v223
      %v228 = vsel %vm226, %v223, %v225
      %vm229 = vcmask 31744
      %v231 = vsel %vm229, %v202, 0
      %vm233 = vcmask 1041408
      %v235 = vsel %vm233, %v227, 0
      %v238 = vsel %vm233, %v228, 0
      %v241 = vsel %vm233, %v225, 0
      %243 = vmatprep.subr.bf16.mxu0 %v238
      %244 = vmatpush1.bf16.msra.mxu0 %v235
      %245 = vmatprep.subr.bf16.mxu0 0
      %246 = vmatpush1.bf16.msra.mxu0 0
      %247 = vmatprep.subr.bf16.mxu0 0
      %248 = vmatpush1.bf16.msra.mxu0 0
      %249 = vmatprep.subr.bf16.mxu0 0
      %250 = vmatpush1.bf16.msra.mxu0 0
      %251 = vmatprep.subr.bf16.mxu0 0
      %252 = vmatpush1.bf16.msra.mxu0 0
      %253 = vmatprep.subr.bf16.mxu0 0
      %254 = vmatpush1.bf16.msra.mxu0 0
      %255 = vmatprep.subr.bf16.mxu0 0
      %256 = vmatpush1.bf16.msra.mxu0 0
      %257 = vmatprep.subr.bf16.mxu0 0
      %258 = vmatpush1.bf16.msra.mxu0 0
      %259 = vmatprep.subr.bf16.mxu0 0
      %260 = vmatpush1.bf16.msra.mxu0 0
      %261 = vmatprep.subr.bf16.mxu0 0
      %262 = vmatpush1.bf16.msra.mxu0 0
      %263 = vmatprep.subr.bf16.mxu0 0
      %264 = vmatpush1.bf16.msra.mxu0 0
      %265 = vmatprep.subr.bf16.mxu0 0
      %266 = vmatpush1.bf16.msra.mxu0 0
      %267 = vmatprep.subr.bf16.mxu0 0
      %268 = vmatpush1.bf16.msra.mxu0 0
      %269 = vmatprep.subr.bf16.mxu0 0
      %270 = vmatpush1.bf16.msra.mxu0 0
      %271 = vmatprep.subr.bf16.mxu0 0
      %272 = vmatpush1.bf16.msra.mxu0 0
      %273 = vmatprep.subr.bf16.mxu0 0
      %274 = vmatpush1.bf16.msra.mxu0 0
      %275 = vmatprep.mubr.bf16.mxu0 0
      %276 = vmatmul.mubr.bf16.gmra.mrb[0].mxu0 %v231
      %v277 = vpop.f32.mrb[0].mxu0
      %v278 = vadd.f32 0.0, %v277
      %v279 = vpop.f32.mrb[0].mxu0
      %v280 = vadd.f32 0.0, %v279
      %v281 = vpop.f32.mrb[0].mxu0
      %v282 = vpop.f32.mrb[0].mxu0
      %283 = vdwg.mxu0
      %284 = vmatprep.subr.bf16.mxu0 0
      %285 = vmatpush1.bf16.msra.mxu0 %v241
      %286 = vmatprep.subr.bf16.mxu0 0
      %287 = vmatpush1.bf16.msra.mxu0 0
      %288 = vmatprep.subr.bf16.mxu0 0
      %289 = vmatpush1.bf16.msra.mxu0 0
      %290 = vmatprep.subr.bf16.mxu0 0
      %291 = vmatpush1.bf16.msra.mxu0 0
      %292 = vmatprep.subr.bf16.mxu0 0
      %293 = vmatpush1.bf16.msra.mxu0 0
      %294 = vmatprep.subr.bf16.mxu0 0
      %295 = vmatpush1.bf16.msra.mxu0 0
      %296 = vmatprep.subr.bf16.mxu0 0
      %297 = vmatpush1.bf16.msra.mxu0 0
      %298 = vmatprep.subr.bf16.mxu0 0
      %299 = vmatpush1.bf16.msra.mxu0 0
      %300 = vmatprep.subr.bf16.mxu0 0
      %301 = vmatpush1.bf16.msra.mxu0 0
      %302 = vmatprep.subr.bf16.mxu0 0
      %303 = vmatpush1.bf16.msra.mxu0 0
      %304 = vmatprep.subr.bf16.mxu0 0
      %305 = vmatpush1.bf16.msra.mxu0 0
      %306 = vmatprep.subr.bf16.mxu0 0
      %307 = vmatpush1.bf16.msra.mxu0 0
      %308 = vmatprep.subr.bf16.mxu0 0
      %309 = vmatpush1.bf16.msra.mxu0 0
      %310 = vmatprep.subr.bf16.mxu0 0
      %311 = vmatpush1.bf16.msra.mxu0 0
      %312 = vmatprep.subr.bf16.mxu0 0
      %313 = vmatpush1.bf16.msra.mxu0 0
      %314 = vmatprep.subr.bf16.mxu0 0
      %315 = vmatpush1.bf16.msra.mxu0 0
      %316 = vmatprep.mubr.bf16.mxu0 0
      %317 = vmatmul.mubr.bf16.gmra.mrb[0].mxu0 %v231
      %v318 = vpop.f32.mrb[0].mxu0
      %v319 = vadd.f32 0.0, %v318
      %v320 = vpop.f32.mrb[0].mxu0
      %v321 = vpop.f32.mrb[0].mxu0
      %v322 = vpop.f32.mrb[0].mxu0
      %323 = vdwg.mxu0
      %v325 = vsel %vm229, %v200, 0
      %v328 = vsel %vm233, %v211, 0
      %v331 = vsel %vm233, %v219, 0
      %v334 = vsel %vm233, %v218, 0
      %336 = vmatprep.subr.bf16.mxu0 %v331
      %337 = vmatpush1.bf16.msra.mxu0 %v328
      %338 = vmatprep.subr.bf16.mxu0 0
      %339 = vmatpush1.bf16.msra.mxu0 0
      %340 = vmatprep.subr.bf16.mxu0 0
      %341 = vmatpush1.bf16.msra.mxu0 0
      %342 = vmatprep.subr.bf16.mxu0 0
      %343 = vmatpush1.bf16.msra.mxu0 0
      %344 = vmatprep.subr.bf16.mxu0 0
      %345 = vmatpush1.bf16.msra.mxu0 0
      %346 = vmatprep.subr.bf16.mxu0 0
      %347 = vmatpush1.bf16.msra.mxu0 0
      %348 = vmatprep.subr.bf16.mxu0 0
      %349 = vmatpush1.bf16.msra.mxu0 0
      %350 = vmatprep.subr.bf16.mxu0 0
      %351 = vmatpush1.bf16.msra.mxu0 0
      %352 = vmatprep.subr.bf16.mxu0 0
      %353 = vmatpush1.bf16.msra.mxu0 0
      %354 = vmatprep.subr.bf16.mxu0 0
      %355 = vmatpush1.bf16.msra.mxu0 0
      %356 = vmatprep.subr.bf16.mxu0 0
      %357 = vmatpush1.bf16.msra.mxu0 0
      %358 = vmatprep.subr.bf16.mxu0 0
      %359 = vmatpush1.bf16.msra.mxu0 0
      %360 = vmatprep.subr.bf16.mxu0 0
      %361 = vmatpush1.bf16.msra.mxu0 0
      %362 = vmatprep.subr.bf16.mxu0 0
      %363 = vmatpush1.bf16.msra.mxu0 0
      %364 = vmatprep.subr.bf16.mxu0 0
      %365 = vmatpush1.bf16.msra.mxu0 0
      %366 = vmatprep.subr.bf16.mxu0 0
      %367 = vmatpush1.bf16.msra.mxu0 0
      %368 = vmatprep.mubr.bf16.mxu0 0
      %369 = vmatmul.mubr.bf16.gmra.mrb[0].mxu0 %v325
      %v370 = vpop.f32.mrb[0].mxu0
      %v371 = vadd.f32 %v278, %v370
      %v372 = vpop.f32.mrb[0].mxu0
      %v373 = vadd.f32 %v280, %v372
      %v374 = vpop.f32.mrb[0].mxu0
      %v375 = vpop.f32.mrb[0].mxu0
      %376 = vdwg.mxu0
      %377 = vmatprep.subr.bf16.mxu0 0
      %378 = vmatpush1.bf16.msra.mxu0 %v334
      %379 = vmatprep.subr.bf16.mxu0 0
      %380 = vmatpush1.bf16.msra.mxu0 0
      %381 = vmatprep.subr.bf16.mxu0 0
      %382 = vmatpush1.bf16.msra.mxu0 0
      %383 = vmatprep.subr.bf16.mxu0 0
      %384 = vmatpush1.bf16.msra.mxu0 0
      %385 = vmatprep.subr.bf16.mxu0 0
      %386 = vmatpush1.bf16.msra.mxu0 0
      %387 = vmatprep.subr.bf16.mxu0 0
      %388 = vmatpush1.bf16.msra.mxu0 0
      %389 = vmatprep.subr.bf16.mxu0 0
      %390 = vmatpush1.bf16.msra.mxu0 0
      %391 = vmatprep.subr.bf16.mxu0 0
      %392 = vmatpush1.bf16.msra.mxu0 0
      %393 = vmatprep.subr.bf16.mxu0 0
      %394 = vmatpush1.bf16.msra.mxu0 0
      %395 = vmatprep.subr.bf16.mxu0 0
      %396 = vmatpush1.bf16.msra.mxu0 0
      %397 = vmatprep.subr.bf16.mxu0 0
      %398 = vmatpush1.bf16.msra.mxu0 0
      %399 = vmatprep.subr.bf16.mxu0 0
      %400 = vmatpush1.bf16.msra.mxu0 0
      %401 = vmatprep.subr.bf16.mxu0 0
      %402 = vmatpush1.bf16.msra.mxu0 0
      %403 = vmatprep.subr.bf16.mxu0 0
      %404 = vmatpush1.bf16.msra.mxu0 0
      %405 = vmatprep.subr.bf16.mxu0 0
      %406 = vmatpush1.bf16.msra.mxu0 0
      %407 = vmatprep.subr.bf16.mxu0 0
      %408 = vmatpush1.bf16.msra.mxu0 0
      %409 = vmatprep.mubr.bf16.mxu0 0
      %410 = vmatmul.mubr.bf16.gmra.mrb[0].mxu0 %v325
      %v411 = vpop.f32.mrb[0].mxu0
      %v412 = vadd.f32 %v319, %v411
      %v413 = vpop.f32.mrb[0].mxu0
      %v414 = vpop.f32.mrb[0].mxu0
      %v415 = vpop.f32.mrb[0].mxu0
      %416 = vdwg.mxu0
      %v417 = vld [vmem:[%s192] sm:$0x3f]
      %s418 = scalar_lea.vmem %s1, 8
      %v419 = vld [vmem:[%s418] sm:$0xf]
      %v421 = vcombine.high %v417, %v417
      %v423 = vunpack.c.l.s4 1983009808
      %v424 = vunpack.c.0.s8 %v423
      %v425 = vlaneseq
      %v426 = vshrl.u32 %v425, 7
      %v427 = vsub.s32 %v424, %v426
      %v428 = vrot.slane %v417, %v427
      %v430 = vunpack.c.l.s4 1983009808
      %v431 = vunpack.c.0.s8 %v430
      %v432 = vlaneseq
      %v433 = vshrl.u32 %v432, 7
      %v434 = vsub.s32 %v431, %v433
      %v435 = vrot.slane %v421, %v434
      %v436 = vcombine.high %v428, %v428
      %437 = vrot.lane.b32.xlu0 %v428, 126
      %v438 = vpop.permute.xlu0 %437
      %439 = vrot.lane.b32.xlu0 %v436, 126
      %v440 = vpop.permute.xlu0 %439
      %441 = vrot.lane.b32.xlu0 %v435, 126
      %v442 = vpop.permute.xlu0 %441
      %vm443 = vcmask 1031168
      %v444 = vsel %vm443, %v438, %v440
      %v445 = vsel %vm443, %v440, %v442
      %v447 = vsel %vm229, %v419, 0
      %v450 = vsel %vm233, %v444, 0
      %v453 = vsel %vm233, %v445, 0
      %v456 = vsel %vm233, %v442, 0
      %458 = vmatprep.subr.bf16.mxu0 %v453
      %459 = vmatpush1.bf16.msra.mxu0 %v450
      %460 = vmatprep.subr.bf16.mxu0 0
      %461 = vmatpush1.bf16.msra.mxu0 0
      %462 = vmatprep.subr.bf16.mxu0 0
      %463 = vmatpush1.bf16.msra.mxu0 0
      %464 = vmatprep.subr.bf16.mxu0 0
      %465 = vmatpush1.bf16.msra.mxu0 0
      %466 = vmatprep.subr.bf16.mxu0 0
      %467 = vmatpush1.bf16.msra.mxu0 0
      %468 = vmatprep.subr.bf16.mxu0 0
      %469 = vmatpush1.bf16.msra.mxu0 0
      %470 = vmatprep.subr.bf16.mxu0 0
      %471 = vmatpush1.bf16.msra.mxu0 0
      %472 = vmatprep.subr.bf16.mxu0 0
      %473 = vmatpush1.bf16.msra.mxu0 0
      %474 = vmatprep.subr.bf16.mxu0 0
      %475 = vmatpush1.bf16.msra.mxu0 0
      %476 = vmatprep.subr.bf16.mxu0 0
      %477 = vmatpush1.bf16.msra.mxu0 0
      %478 = vmatprep.subr.bf16.mxu0 0
      %479 = vmatpush1.bf16.msra.mxu0 0
      %480 = vmatprep.subr.bf16.mxu0 0
      %481 = vmatpush1.bf16.msra.mxu0 0
      %482 = vmatprep.subr.bf16.mxu0 0
      %483 = vmatpush1.bf16.msra.mxu0 0
      %484 = vmatprep.subr.bf16.mxu0 0
      %485 = vmatpush1.bf16.msra.mxu0 0
      %486 = vmatprep.subr.bf16.mxu0 0
      %487 = vmatpush1.bf16.msra.mxu0 0
      %488 = vmatprep.subr.bf16.mxu0 0
      %489 = vmatpush1.bf16.msra.mxu0 0
      %490 = vmatprep.mubr.bf16.mxu0 0
      %491 = vmatmul.mubr.bf16.gmra.mrb[0].mxu0 %v447
      %v492 = vpop.f32.mrb[0].mxu0
      %v493 = vadd.f32 0.0, %v492
      %v494 = vpop.f32.mrb[0].mxu0
      %v495 = vadd.f32 0.0, %v494
      %v496 = vpop.f32.mrb[0].mxu0
      %v497 = vpop.f32.mrb[0].mxu0
      %498 = vdwg.mxu0
      %499 = vmatprep.subr.bf16.mxu0 0
      %500 = vmatpush1.bf16.msra.mxu0 %v456
      %501 = vmatprep.subr.bf16.mxu0 0
      %502 = vmatpush1.bf16.msra.mxu0 0
      %503 = vmatprep.subr.bf16.mxu0 0
      %504 = vmatpush1.bf16.msra.mxu0 0
      %505 = vmatprep.subr.bf16.mxu0 0
      %506 = vmatpush1.bf16.msra.mxu0 0
      %507 = vmatprep.subr.bf16.mxu0 0
      %508 = vmatpush1.bf16.msra.mxu0 0
      %509 = vmatprep.subr.bf16.mxu0 0
      %510 = vmatpush1.bf16.msra.mxu0 0
      %511 = vmatprep.subr.bf16.mxu0 0
      %512 = vmatpush1.bf16.msra.mxu0 0
      %513 = vmatprep.subr.bf16.mxu0 0
      %514 = vmatpush1.bf16.msra.mxu0 0
      %515 = vmatprep.subr.bf16.mxu0 0
      %516 = vmatpush1.bf16.msra.mxu0 0
      %517 = vmatprep.subr.bf16.mxu0 0
      %518 = vmatpush1.bf16.msra.mxu0 0
      %519 = vmatprep.subr.bf16.mxu0 0
      %520 = vmatpush1.bf16.msra.mxu0 0
      %521 = vmatprep.subr.bf16.mxu0 0
      %522 = vmatpush1.bf16.msra.mxu0 0
      %523 = vmatprep.subr.bf16.mxu0 0
      %524 = vmatpush1.bf16.msra.mxu0 0
      %525 = vmatprep.subr.bf16.mxu0 0
      %526 = vmatpush1.bf16.msra.mxu0 0
      %527 = vmatprep.subr.bf16.mxu0 0
      %528 = vmatpush1.bf16.msra.mxu0 0
      %529 = vmatprep.subr.bf16.mxu0 0
      %530 = vmatpush1.bf16.msra.mxu0 0
      %531 = vmatprep.mubr.bf16.mxu0 0
      %532 = vmatmul.mubr.bf16.gmra.mrb[0].mxu0 %v447
      %v533 = vpop.f32.mrb[0].mxu0
      %v534 = vadd.f32 0.0, %v533
      %v535 = vpop.f32.mrb[0].mxu0
      %v536 = vpop.f32.mrb[0].mxu0
      %v537 = vpop.f32.mrb[0].mxu0
      %538 = vdwg.mxu0
      %v539 = vadd.f32 %v371, %v493
      %v540 = vadd.f32 %v373, %v495
      %v541 = vadd.f32 %v412, %v534
      %v542 = vld [vmem:[%s192] sm:$0x3f]
      %s543 = scalar_lea.vmem %s1, 12
      %v544 = vld [vmem:[%s543] sm:$0xf]
      %v546 = vcombine.high %v542, %v542
      %v548 = vunpack.c.l.s4 1983009808
      %v549 = vunpack.c.0.s8 %v548
      %v550 = vlaneseq
      %v551 = vshrl.u32 %v550, 7
      %v552 = vsub.s32 %v549, %v551
      %v553 = vrot.slane %v542, %v552
      %v555 = vunpack.c.l.s4 1983009808
      %v556 = vunpack.c.0.s8 %v555
      %v557 = vlaneseq
      %v558 = vshrl.u32 %v557, 7
      %v559 = vsub.s32 %v556, %v558
      %v560 = vrot.slane %v546, %v559
      %v561 = vcombine.high %v553, %v553
      %562 = vrot.lane.b32.xlu0 %v553, 110
      %v563 = vpop.permute.xlu0 %562
      %564 = vrot.lane.b32.xlu0 %v561, 110
      %v565 = vpop.permute.xlu0 %564
      %566 = vrot.lane.b32.xlu0 %v560, 110
      %v567 = vpop.permute.xlu0 %566
      %vm568 = vcmask 900096
      %v569 = vsel %vm568, %v563, %v565
      %v570 = vsel %vm568, %v565, %v567
      %v572 = vsel %vm229, %v544, 0
      %v575 = vsel %vm233, %v569, 0
      %v578 = vsel %vm233, %v570, 0
      %v581 = vsel %vm233, %v567, 0
      %583 = vmatprep.subr.bf16.mxu0 %v578
      %584 = vmatpush1.bf16.msra.mxu0 %v575
      %585 = vmatprep.subr.bf16.mxu0 0
      %586 = vmatpush1.bf16.msra.mxu0 0
      %587 = vmatprep.subr.bf16.mxu0 0
      %588 = vmatpush1.bf16.msra.mxu0 0
      %589 = vmatprep.subr.bf16.mxu0 0
      %590 = vmatpush1.bf16.msra.mxu0 0
      %591 = vmatprep.subr.bf16.mxu0 0
      %592 = vmatpush1.bf16.msra.mxu0 0
      %593 = vmatprep.subr.bf16.mxu0 0
      %594 = vmatpush1.bf16.msra.mxu0 0
      %595 = vmatprep.subr.bf16.mxu0 0
      %596 = vmatpush1.bf16.msra.mxu0 0
      %597 = vmatprep.subr.bf16.mxu0 0
      %598 = vmatpush1.bf16.msra.mxu0 0
      %599 = vmatprep.subr.bf16.mxu0 0
      %600 = vmatpush1.bf16.msra.mxu0 0
      %601 = vmatprep.subr.bf16.mxu0 0
      %602 = vmatpush1.bf16.msra.mxu0 0
      %603 = vmatprep.subr.bf16.mxu0 0
      %604 = vmatpush1.bf16.msra.mxu0 0
      %605 = vmatprep.subr.bf16.mxu0 0
      %606 = vmatpush1.bf16.msra.mxu0 0
      %607 = vmatprep.subr.bf16.mxu0 0
      %608 = vmatpush1.bf16.msra.mxu0 0
      %609 = vmatprep.subr.bf16.mxu0 0
      %610 = vmatpush1.bf16.msra.mxu0 0
      %611 = vmatprep.subr.bf16.mxu0 0
      %612 = vmatpush1.bf16.msra.mxu0 0
      %613 = vmatprep.subr.bf16.mxu0 0
      %614 = vmatpush1.bf16.msra.mxu0 0
      %615 = vmatprep.mubr.bf16.mxu0 0
      %616 = vmatmul.mubr.bf16.gmra.mrb[0].mxu0 %v572
      %v617 = vpop.f32.mrb[0].mxu0
      %v618 = vadd.f32 0.0, %v617
      %v619 = vpop.f32.mrb[0].mxu0
      %v620 = vadd.f32 0.0, %v619
      %v621 = vpop.f32.mrb[0].mxu0
      %v622 = vpop.f32.mrb[0].mxu0
      %623 = vdwg.mxu0
      %624 = vmatprep.subr.bf16.mxu0 0
      %625 = vmatpush1.bf16.msra.mxu0 %v581
      %626 = vmatprep.subr.bf16.mxu0 0
      %627 = vmatpush1.bf16.msra.mxu0 0
      %628 = vmatprep.subr.bf16.mxu0 0
      %629 = vmatpush1.bf16.msra.mxu0 0
      %630 = vmatprep.subr.bf16.mxu0 0
      %631 = vmatpush1.bf16.msra.mxu0 0
      %632 = vmatprep.subr.bf16.mxu0 0
      %633 = vmatpush1.bf16.msra.mxu0 0
      %634 = vmatprep.subr.bf16.mxu0 0
      %635 = vmatpush1.bf16.msra.mxu0 0
      %636 = vmatprep.subr.bf16.mxu0 0
      %637 = vmatpush1.bf16.msra.mxu0 0
      %638 = vmatprep.subr.bf16.mxu0 0
      %639 = vmatpush1.bf16.msra.mxu0 0
      %640 = vmatprep.subr.bf16.mxu0 0
      %641 = vmatpush1.bf16.msra.mxu0 0
      %642 = vmatprep.subr.bf16.mxu0 0
      %643 = vmatpush1.bf16.msra.mxu0 0
      %644 = vmatprep.subr.bf16.mxu0 0
      %645 = vmatpush1.bf16.msra.mxu0 0
      %646 = vmatprep.subr.bf16.mxu0 0
      %647 = vmatpush1.bf16.msra.mxu0 0
      %648 = vmatprep.subr.bf16.mxu0 0
      %649 = vmatpush1.bf16.msra.mxu0 0
      %650 = vmatprep.subr.bf16.mxu0 0
      %651 = vmatpush1.bf16.msra.mxu0 0
      %652 = vmatprep.subr.bf16.mxu0 0
      %653 = vmatpush1.bf16.msra.mxu0 0
      %654 = vmatprep.subr.bf16.mxu0 0
      %655 = vmatpush1.bf16.msra.mxu0 0
      %656 = vmatprep.mubr.bf16.mxu0 0
      %657 = vmatmul.mubr.bf16.gmra.mrb[0].mxu0 %v572
      %v658 = vpop.f32.mrb[0].mxu0
      %v659 = vadd.f32 0.0, %v658
      %v660 = vpop.f32.mrb[0].mxu0
      %v661 = vpop.f32.mrb[0].mxu0
      %v662 = vpop.f32.mrb[0].mxu0
      %663 = vdwg.mxu0
      %v664 = vadd.f32 %v539, %v618
      %v665 = vadd.f32 %v540, %v620
      %v666 = vadd.f32 %v541, %v659
      %v667 = vld [vmem:[%s192] sm:$0x3f]
      %s668 = scalar_lea.vmem %s1, 16
      %v669 = vld [vmem:[%s668] sm:$0xf]
      %v671 = vcombine.high %v667, %v667
      %v673 = vunpack.c.l.s4 1983009808
      %v674 = vunpack.c.0.s8 %v673
      %v675 = vlaneseq
      %v676 = vshrl.u32 %v675, 7
      %v677 = vsub.s32 %v674, %v676
      %v678 = vrot.slane %v667, %v677
      %v680 = vunpack.c.l.s4 1983009808
      %v681 = vunpack.c.0.s8 %v680
      %v682 = vlaneseq
      %v683 = vshrl.u32 %v682, 7
      %v684 = vsub.s32 %v681, %v683
      %v685 = vrot.slane %v671, %v684
      %v686 = vcombine.high %v678, %v678
      %687 = vrot.lane.b32.xlu0 %v678, 109
      %v688 = vpop.permute.xlu0 %687
      %689 = vrot.lane.b32.xlu0 %v686, 109
      %v690 = vpop.permute.xlu0 %689
      %691 = vrot.lane.b32.xlu0 %v685, 109
      %v692 = vpop.permute.xlu0 %691
      %vm693 = vcmask 891904
      %v694 = vsel %vm693, %v688, %v690
      %v695 = vsel %vm693, %v690, %v692
      %v697 = vsel %vm229, %v669, 0
      %v700 = vsel %vm233, %v694, 0
      %v703 = vsel %vm233, %v695, 0
      %v706 = vsel %vm233, %v692, 0
      %708 = vmatprep.subr.bf16.mxu0 %v703
      %709 = vmatpush1.bf16.msra.mxu0 %v700
      %710 = vmatprep.subr.bf16.mxu0 0
      %711 = vmatpush1.bf16.msra.mxu0 0
      %712 = vmatprep.subr.bf16.mxu0 0
      %713 = vmatpush1.bf16.msra.mxu0 0
      %714 = vmatprep.subr.bf16.mxu0 0
      %715 = vmatpush1.bf16.msra.mxu0 0
      %716 = vmatprep.subr.bf16.mxu0 0
      %717 = vmatpush1.bf16.msra.mxu0 0
      %718 = vmatprep.subr.bf16.mxu0 0
      %719 = vmatpush1.bf16.msra.mxu0 0
      %720 = vmatprep.subr.bf16.mxu0 0
      %721 = vmatpush1.bf16.msra.mxu0 0
      %722 = vmatprep.subr.bf16.mxu0 0
      %723 = vmatpush1.bf16.msra.mxu0 0
      %724 = vmatprep.subr.bf16.mxu0 0
      %725 = vmatpush1.bf16.msra.mxu0 0
      %726 = vmatprep.subr.bf16.mxu0 0
      %727 = vmatpush1.bf16.msra.mxu0 0
      %728 = vmatprep.subr.bf16.mxu0 0
      %729 = vmatpush1.bf16.msra.mxu0 0
      %730 = vmatprep.subr.bf16.mxu0 0
      %731 = vmatpush1.bf16.msra.mxu0 0
      %732 = vmatprep.subr.bf16.mxu0 0
      %733 = vmatpush1.bf16.msra.mxu0 0
      %734 = vmatprep.subr.bf16.mxu0 0
      %735 = vmatpush1.bf16.msra.mxu0 0
      %736 = vmatprep.subr.bf16.mxu0 0
      %737 = vmatpush1.bf16.msra.mxu0 0
      %738 = vmatprep.subr.bf16.mxu0 0
      %739 = vmatpush1.bf16.msra.mxu0 0
      %740 = vmatprep.mubr.bf16.mxu0 0
      %741 = vmatmul.mubr.bf16.gmra.mrb[0].mxu0 %v697
      %v742 = vpop.f32.mrb[0].mxu0
      %v743 = vadd.f32 0.0, %v742
      %v744 = vpop.f32.mrb[0].mxu0
      %v745 = vadd.f32 0.0, %v744
      %v746 = vpop.f32.mrb[0].mxu0
      %v747 = vpop.f32.mrb[0].mxu0
      %748 = vdwg.mxu0
      %749 = vmatprep.subr.bf16.mxu0 0
      %750 = vmatpush1.bf16.msra.mxu0 %v706
      %751 = vmatprep.subr.bf16.mxu0 0
      %752 = vmatpush1.bf16.msra.mxu0 0
      %753 = vmatprep.subr.bf16.mxu0 0
      %754 = vmatpush1.bf16.msra.mxu0 0
      %755 = vmatprep.subr.bf16.mxu0 0
      %756 = vmatpush1.bf16.msra.mxu0 0
      %757 = vmatprep.subr.bf16.mxu0 0
      %758 = vmatpush1.bf16.msra.mxu0 0
      %759 = vmatprep.subr.bf16.mxu0 0
      %760 = vmatpush1.bf16.msra.mxu0 0
      %761 = vmatprep.subr.bf16.mxu0 0
      %762 = vmatpush1.bf16.msra.mxu0 0
      %763 = vmatprep.subr.bf16.mxu0 0
      %764 = vmatpush1.bf16.msra.mxu0 0
      %765 = vmatprep.subr.bf16.mxu0 0
      %766 = vmatpush1.bf16.msra.mxu0 0
      %767 = vmatprep.subr.bf16.mxu0 0
      %768 = vmatpush1.bf16.msra.mxu0 0
      %769 = vmatprep.subr.bf16.mxu0 0
      %770 = vmatpush1.bf16.msra.mxu0 0
      %771 = vmatprep.subr.bf16.mxu0 0
      %772 = vmatpush1.bf16.msra.mxu0 0
      %773 = vmatprep.subr.bf16.mxu0 0
      %774 = vmatpush1.bf16.msra.mxu0 0
      %775 = vmatprep.subr.bf16.mxu0 0
      %776 = vmatpush1.bf16.msra.mxu0 0
      %777 = vmatprep.subr.bf16.mxu0 0
      %778 = vmatpush1.bf16.msra.mxu0 0
      %779 = vmatprep.subr.bf16.mxu0 0
      %780 = vmatpush1.bf16.msra.mxu0 0
      %781 = vmatprep.mubr.bf16.mxu0 0
      %782 = vmatmul.mubr.bf16.gmra.mrb[0].mxu0 %v697
      %v783 = vpop.f32.mrb[0].mxu0
      %v784 = vadd.f32 0.0, %v783
      %v785 = vpop.f32.mrb[0].mxu0
      %v786 = vpop.f32.mrb[0].mxu0
      %v787 = vpop.f32.mrb[0].mxu0
      %788 = vdwg.mxu0
      %v789 = vadd.f32 %v664, %v743
      %v790 = vadd.f32 %v665, %v745
      %v791 = vadd.f32 %v666, %v784
      %v792 = vld [vmem:[%s192] sm:$0x3f]
      %s793 = scalar_lea.vmem %s1, 20
      %v794 = vld [vmem:[%s793] sm:$0xf]
      %v796 = vcombine.high %v792, %v792
      %v798 = vunpack.c.l.s4 1983009808
      %v799 = vunpack.c.0.s8 %v798
      %v800 = vlaneseq
      %v801 = vshrl.u32 %v800, 7
      %v802 = vsub.s32 %v799, %v801
      %v803 = vrot.slane %v792, %v802
      %v805 = vunpack.c.l.s4 1983009808
      %v806 = vunpack.c.0.s8 %v805
      %v807 = vlaneseq
      %v808 = vshrl.u32 %v807, 7
      %v809 = vsub.s32 %v806, %v808
      %v810 = vrot.slane %v796, %v809
      %v811 = vcombine.high %v803, %v803
      %812 = vrot.lane.b32.xlu0 %v803, 108
      %v813 = vpop.permute.xlu0 %812
      %814 = vrot.lane.b32.xlu0 %v811, 108
      %v815 = vpop.permute.xlu0 %814
      %816 = vrot.lane.b32.xlu0 %v810, 108
      %v817 = vpop.permute.xlu0 %816
      %vm818 = vcmask 883712
      %v819 = vsel %vm818, %v813, %v815
      %v820 = vsel %vm818, %v815, %v817
      %v822 = vsel %vm229, %v794, 0
      %v825 = vsel %vm233, %v819, 0
      %v828 = vsel %vm233, %v820, 0
      %v831 = vsel %vm233, %v817, 0
      %833 = vmatprep.subr.bf16.mxu0 %v828
      %834 = vmatpush1.bf16.msra.mxu0 %v825
      %835 = vmatprep.subr.bf16.mxu0 0
      %836 = vmatpush1.bf16.msra.mxu0 0
      %837 = vmatprep.subr.bf16.mxu0 0
      %838 = vmatpush1.bf16.msra.mxu0 0
      %839 = vmatprep.subr.bf16.mxu0 0
      %840 = vmatpush1.bf16.msra.mxu0 0
      %841 = vmatprep.subr.bf16.mxu0 0
      %842 = vmatpush1.bf16.msra.mxu0 0
      %843 = vmatprep.subr.bf16.mxu0 0
      %844 = vmatpush1.bf16.msra.mxu0 0
      %845 = vmatprep.subr.bf16.mxu0 0
      %846 = vmatpush1.bf16.msra.mxu0 0
      %847 = vmatprep.subr.bf16.mxu0 0
      %848 = vmatpush1.bf16.msra.mxu0 0
      %849 = vmatprep.subr.bf16.mxu0 0
      %850 = vmatpush1.bf16.msra.mxu0 0
      %851 = vmatprep.subr.bf16.mxu0 0
      %852 = vmatpush1.bf16.msra.mxu0 0
      %853 = vmatprep.subr.bf16.mxu0 0
      %854 = vmatpush1.bf16.msra.mxu0 0
      %855 = vmatprep.subr.bf16.mxu0 0
      %856 = vmatpush1.bf16.msra.mxu0 0
      %857 = vmatprep.subr.bf16.mxu0 0
      %858 = vmatpush1.bf16.msra.mxu0 0
      %859 = vmatprep.subr.bf16.mxu0 0
      %860 = vmatpush1.bf16.msra.mxu0 0
      %861 = vmatprep.subr.bf16.mxu0 0
      %862 = vmatpush1.bf16.msra.mxu0 0
      %863 = vmatprep.subr.bf16.mxu0 0
      %864 = vmatpush1.bf16.msra.mxu0 0
      %865 = vmatprep.mubr.bf16.mxu0 0
      %866 = vmatmul.mubr.bf16.gmra.mrb[0].mxu0 %v822
      %v867 = vpop.f32.mrb[0].mxu0
      %v868 = vadd.f32 0.0, %v867
      %v869 = vpop.f32.mrb[0].mxu0
      %v870 = vadd.f32 0.0, %v869
      %v871 = vpop.f32.mrb[0].mxu0
      %v872 = vpop.f32.mrb[0].mxu0
      %873 = vdwg.mxu0
      %874 = vmatprep.subr.bf16.mxu0 0
      %875 = vmatpush1.bf16.msra.mxu0 %v831
      %876 = vmatprep.subr.bf16.mxu0 0
      %877 = vmatpush1.bf16.msra.mxu0 0
      %878 = vmatprep.subr.bf16.mxu0 0
      %879 = vmatpush1.bf16.msra.mxu0 0
      %880 = vmatprep.subr.bf16.mxu0 0
      %881 = vmatpush1.bf16.msra.mxu0 0
      %882 = vmatprep.subr.bf16.mxu0 0
      %883 = vmatpush1.bf16.msra.mxu0 0
      %884 = vmatprep.subr.bf16.mxu0 0
      %885 = vmatpush1.bf16.msra.mxu0 0
      %886 = vmatprep.subr.bf16.mxu0 0
      %887 = vmatpush1.bf16.msra.mxu0 0
      %888 = vmatprep.subr.bf16.mxu0 0
      %889 = vmatpush1.bf16.msra.mxu0 0
      %890 = vmatprep.subr.bf16.mxu0 0
      %891 = vmatpush1.bf16.msra.mxu0 0
      %892 = vmatprep.subr.bf16.mxu0 0
      %893 = vmatpush1.bf16.msra.mxu0 0
      %894 = vmatprep.subr.bf16.mxu0 0
      %895 = vmatpush1.bf16.msra.mxu0 0
      %896 = vmatprep.subr.bf16.mxu0 0
      %897 = vmatpush1.bf16.msra.mxu0 0
      %898 = vmatprep.subr.bf16.mxu0 0
      %899 = vmatpush1.bf16.msra.mxu0 0
      %900 = vmatprep.subr.bf16.mxu0 0
      %901 = vmatpush1.bf16.msra.mxu0 0
      %902 = vmatprep.subr.bf16.mxu0 0
      %903 = vmatpush1.bf16.msra.mxu0 0
      %904 = vmatprep.subr.bf16.mxu0 0
      %905 = vmatpush1.bf16.msra.mxu0 0
      %906 = vmatprep.mubr.bf16.mxu0 0
      %907 = vmatmul.mubr.bf16.gmra.mrb[0].mxu0 %v822
      %v908 = vpop.f32.mrb[0].mxu0
      %v909 = vadd.f32 0.0, %v908
      %v910 = vpop.f32.mrb[0].mxu0
      %v911 = vpop.f32.mrb[0].mxu0
      %v912 = vpop.f32.mrb[0].mxu0
      %913 = vdwg.mxu0
      %v914 = vadd.f32 %v789, %v868
      %v915 = vadd.f32 %v790, %v870
      %v916 = vadd.f32 %v791, %v909
      %v917 = vld [vmem:[%s192] sm:$0x3f]
      %s918 = scalar_lea.vmem %s1, 24
      %v919 = vld [vmem:[%s918] sm:$0xf]
      %v921 = vcombine.high %v917, %v917
      %v923 = vunpack.c.l.s4 1983009808
      %v924 = vunpack.c.0.s8 %v923
      %v925 = vlaneseq
      %v926 = vshrl.u32 %v925, 7
      %v927 = vsub.s32 %v924, %v926
      %v928 = vrot.slane %v917, %v927
      %v930 = vunpack.c.l.s4 1983009808
      %v931 = vunpack.c.0.s8 %v930
      %v932 = vlaneseq
      %v933 = vshrl.u32 %v932, 7
      %v934 = vsub.s32 %v931, %v933
      %v935 = vrot.slane %v921, %v934
      %v936 = vcombine.high %v928, %v928
      %937 = vrot.lane.b32.xlu0 %v928, 92
      %v938 = vpop.permute.xlu0 %937
      %939 = vrot.lane.b32.xlu0 %v936, 92
      %v940 = vpop.permute.xlu0 %939
      %941 = vrot.lane.b32.xlu0 %v935, 92
      %v942 = vpop.permute.xlu0 %941
      %vm943 = vcmask 752640
      %v944 = vsel %vm943, %v938, %v940
      %v945 = vsel %vm943, %v940, %v942
      %v947 = vsel %vm229, %v919, 0
      %v950 = vsel %vm233, %v944, 0
      %v953 = vsel %vm233, %v945, 0
      %v956 = vsel %vm233, %v942, 0
      %958 = vmatprep.subr.bf16.mxu0 %v953
      %959 = vmatpush1.bf16.msra.mxu0 %v950
      %960 = vmatprep.subr.bf16.mxu0 0
      %961 = vmatpush1.bf16.msra.mxu0 0
      %962 = vmatprep.subr.bf16.mxu0 0
      %963 = vmatpush1.bf16.msra.mxu0 0
      %964 = vmatprep.subr.bf16.mxu0 0
      %965 = vmatpush1.bf16.msra.mxu0 0
      %966 = vmatprep.subr.bf16.mxu0 0
      %967 = vmatpush1.bf16.msra.mxu0 0
      %968 = vmatprep.subr.bf16.mxu0 0
      %969 = vmatpush1.bf16.msra.mxu0 0
      %970 = vmatprep.subr.bf16.mxu0 0
      %971 = vmatpush1.bf16.msra.mxu0 0
      %972 = vmatprep.subr.bf16.mxu0 0
      %973 = vmatpush1.bf16.msra.mxu0 0
      %974 = vmatprep.subr.bf16.mxu0 0
      %975 = vmatpush1.bf16.msra.mxu0 0
      %976 = vmatprep.subr.bf16.mxu0 0
      %977 = vmatpush1.bf16.msra.mxu0 0
      %978 = vmatprep.subr.bf16.mxu0 0
      %979 = vmatpush1.bf16.msra.mxu0 0
      %980 = vmatprep.subr.bf16.mxu0 0
      %981 = vmatpush1.bf16.msra.mxu0 0
      %982 = vmatprep.subr.bf16.mxu0 0
      %983 = vmatpush1.bf16.msra.mxu0 0
      %984 = vmatprep.subr.bf16.mxu0 0
      %985 = vmatpush1.bf16.msra.mxu0 0
      %986 = vmatprep.subr.bf16.mxu0 0
      %987 = vmatpush1.bf16.msra.mxu0 0
      %988 = vmatprep.subr.bf16.mxu0 0
      %989 = vmatpush1.bf16.msra.mxu0 0
      %990 = vmatprep.mubr.bf16.mxu0 0
      %991 = vmatmul.mubr.bf16.gmra.mrb[0].mxu0 %v947
      %v992 = vpop.f32.mrb[0].mxu0
      %v993 = vadd.f32 0.0, %v992
      %v994 = vpop.f32.mrb[0].mxu0
      %v995 = vadd.f32 0.0, %v994
      %v996 = vpop.f32.mrb[0].mxu0
      %v997 = vpop.f32.mrb[0].mxu0
      %998 = vdwg.mxu0
      %999 = vmatprep.subr.bf16.mxu0 0
      %1000 = vmatpush1.bf16.msra.mxu0 %v956
      %1001 = vmatprep.subr.bf16.mxu0 0
      %1002 = vmatpush1.bf16.msra.mxu0 0
      %1003 = vmatprep.subr.bf16.mxu0 0
      %1004 = vmatpush1.bf16.msra.mxu0 0
      %1005 = vmatprep.subr.bf16.mxu0 0
      %1006 = vmatpush1.bf16.msra.mxu0 0
      %1007 = vmatprep.subr.bf16.mxu0 0
      %1008 = vmatpush1.bf16.msra.mxu0 0
      %1009 = vmatprep.subr.bf16.mxu0 0
      %1010 = vmatpush1.bf16.msra.mxu0 0
      %1011 = vmatprep.subr.bf16.mxu0 0
      %1012 = vmatpush1.bf16.msra.mxu0 0
      %1013 = vmatprep.subr.bf16.mxu0 0
      %1014 = vmatpush1.bf16.msra.mxu0 0
      %1015 = vmatprep.subr.bf16.mxu0 0
      %1016 = vmatpush1.bf16.msra.mxu0 0
      %1017 = vmatprep.subr.bf16.mxu0 0
      %1018 = vmatpush1.bf16.msra.mxu0 0
      %1019 = vmatprep.subr.bf16.mxu0 0
      %1020 = vmatpush1.bf16.msra.mxu0 0
      %1021 = vmatprep.subr.bf16.mxu0 0
      %1022 = vmatpush1.bf16.msra.mxu0 0
      %1023 = vmatprep.subr.bf16.mxu0 0
      %1024 = vmatpush1.bf16.msra.mxu0 0
      %1025 = vmatprep.subr.bf16.mxu0 0
      %1026 = vmatpush1.bf16.msra.mxu0 0
      %1027 = vmatprep.subr.bf16.mxu0 0
      %1028 = vmatpush1.bf16.msra.mxu0 0
      %1029 = vmatprep.subr.bf16.mxu0 0
      %1030 = vmatpush1.bf16.msra.mxu0 0
      %1031 = vmatprep.mubr.bf16.mxu0 0
      %1032 = vmatmul.mubr.bf16.gmra.mrb[0].mxu0 %v947
      %v1033 = vpop.f32.mrb[0].mxu0
      %v1034 = vadd.f32 0.0, %v1033
      %v1035 = vpop.f32.mrb[0].mxu0
      %v1036 = vpop.f32.mrb[0].mxu0
      %v1037 = vpop.f32.mrb[0].mxu0
      %1038 = vdwg.mxu0
      %v1039 = vadd.f32 %v914, %v993
      %v1040 = vadd.f32 %v915, %v995
      %v1041 = vadd.f32 %v916, %v1034
      %v1042 = vld [vmem:[%s192] sm:$0x3f]
      %s1043 = scalar_lea.vmem %s1, 28
      %v1044 = vld [vmem:[%s1043] sm:$0xf]
      %v1046 = vcombine.high %v1042, %v1042
      %v1048 = vunpack.c.l.s4 1983009808
      %v1049 = vunpack.c.0.s8 %v1048
      %v1050 = vlaneseq
      %v1051 = vshrl.u32 %v1050, 7
      %v1052 = vsub.s32 %v1049, %v1051
      %v1053 = vrot.slane %v1042, %v1052
      %v1055 = vunpack.c.l.s4 1983009808
      %v1056 = vunpack.c.0.s8 %v1055
      %v1057 = vlaneseq
      %v1058 = vshrl.u32 %v1057, 7
      %v1059 = vsub.s32 %v1056, %v1058
      %v1060 = vrot.slane %v1046, %v1059
      %v1061 = vcombine.high %v1053, %v1053
      %1062 = vrot.lane.b32.xlu0 %v1053, 91
      %v1063 = vpop.permute.xlu0 %1062
      %1064 = vrot.lane.b32.xlu0 %v1061, 91
      %v1065 = vpop.permute.xlu0 %1064
      %1066 = vrot.lane.b32.xlu0 %v1060, 91
      %v1067 = vpop.permute.xlu0 %1066
      %vm1068 = vcmask 744448
      %v1069 = vsel %vm1068, %v1063, %v1065
      %v1070 = vsel %vm1068, %v1065, %v1067
      %v1072 = vsel %vm229, %v1044, 0
      %v1075 = vsel %vm233, %v1069, 0
      %v1078 = vsel %vm233, %v1070, 0
      %v1081 = vsel %vm233, %v1067, 0
      %1083 = vmatprep.subr.bf16.mxu0 %v1078
      %1084 = vmatpush1.bf16.msra.mxu0 %v1075
      %1085 = vmatprep.subr.bf16.mxu0 0
      %1086 = vmatpush1.bf16.msra.mxu0 0
      %1087 = vmatprep.subr.bf16.mxu0 0
      %1088 = vmatpush1.bf16.msra.mxu0 0
      %1089 = vmatprep.subr.bf16.mxu0 0
      %1090 = vmatpush1.bf16.msra.mxu0 0
      %1091 = vmatprep.subr.bf16.mxu0 0
      %1092 = vmatpush1.bf16.msra.mxu0 0
      %1093 = vmatprep.subr.bf16.mxu0 0
      %1094 = vmatpush1.bf16.msra.mxu0 0
      %1095 = vmatprep.subr.bf16.mxu0 0
      %1096 = vmatpush1.bf16.msra.mxu0 0
      %1097 = vmatprep.subr.bf16.mxu0 0
      %1098 = vmatpush1.bf16.msra.mxu0 0
      %1099 = vmatprep.subr.bf16.mxu0 0
      %1100 = vmatpush1.bf16.msra.mxu0 0
      %1101 = vmatprep.subr.bf16.mxu0 0
      %1102 = vmatpush1.bf16.msra.mxu0 0
      %1103 = vmatprep.subr.bf16.mxu0 0
      %1104 = vmatpush1.bf16.msra.mxu0 0
      %1105 = vmatprep.subr.bf16.mxu0 0
      %1106 = vmatpush1.bf16.msra.mxu0 0
      %1107 = vmatprep.subr.bf16.mxu0 0
      %1108 = vmatpush1.bf16.msra.mxu0 0
      %1109 = vmatprep.subr.bf16.mxu0 0
      %1110 = vmatpush1.bf16.msra.mxu0 0
      %1111 = vmatprep.subr.bf16.mxu0 0
      %1112 = vmatpush1.bf16.msra.mxu0 0
      %1113 = vmatprep.subr.bf16.mxu0 0
      %1114 = vmatpush1.bf16.msra.mxu0 0
      %1115 = vmatprep.mubr.bf16.mxu0 0
      %1116 = vmatmul.mubr.bf16.gmra.mrb[0].mxu0 %v1072
      %v1117 = vpop.f32.mrb[0].mxu0
      %v1118 = vadd.f32 0.0, %v1117
      %v1119 = vpop.f32.mrb[0].mxu0
      %v1120 = vadd.f32 0.0, %v1119
      %v1121 = vpop.f32.mrb[0].mxu0
      %v1122 = vpop.f32.mrb[0].mxu0
      %1123 = vdwg.mxu0
      %1124 = vmatprep.subr.bf16.mxu0 0
      %1125 = vmatpush1.bf16.msra.mxu0 %v1081
      %1126 = vmatprep.subr.bf16.mxu0 0
      %1127 = vmatpush1.bf16.msra.mxu0 0
      %1128 = vmatprep.subr.bf16.mxu0 0
      %1129 = vmatpush1.bf16.msra.mxu0 0
      %1130 = vmatprep.subr.bf16.mxu0 0
      %1131 = vmatpush1.bf16.msra.mxu0 0
      %1132 = vmatprep.subr.bf16.mxu0 0
      %1133 = vmatpush1.bf16.msra.mxu0 0
      %1134 = vmatprep.subr.bf16.mxu0 0
      %1135 = vmatpush1.bf16.msra.mxu0 0
      %1136 = vmatprep.subr.bf16.mxu0 0
      %1137 = vmatpush1.bf16.msra.mxu0 0
      %1138 = vmatprep.subr.bf16.mxu0 0
      %1139 = vmatpush1.bf16.msra.mxu0 0
      %1140 = vmatprep.subr.bf16.mxu0 0
      %1141 = vmatpush1.bf16.msra.mxu0 0
      %1142 = vmatprep.subr.bf16.mxu0 0
      %1143 = vmatpush1.bf16.msra.mxu0 0
      %1144 = vmatprep.subr.bf16.mxu0 0
      %1145 = vmatpush1.bf16.msra.mxu0 0
      %1146 = vmatprep.subr.bf16.mxu0 0
      %1147 = vmatpush1.bf16.msra.mxu0 0
      %1148 = vmatprep.subr.bf16.mxu0 0
      %1149 = vmatpush1.bf16.msra.mxu0 0
      %1150 = vmatprep.subr.bf16.mxu0 0
      %1151 = vmatpush1.bf16.msra.mxu0 0
      %1152 = vmatprep.subr.bf16.mxu0 0
      %1153 = vmatpush1.bf16.msra.mxu0 0
      %1154 = vmatprep.subr.bf16.mxu0 0
      %1155 = vmatpush1.bf16.msra.mxu0 0
      %1156 = vmatprep.mubr.bf16.mxu0 0
      %1157 = vmatmul.mubr.bf16.gmra.mrb[0].mxu0 %v1072
      %v1158 = vpop.f32.mrb[0].mxu0
      %v1159 = vadd.f32 0.0, %v1158
      %v1160 = vpop.f32.mrb[0].mxu0
      %v1161 = vpop.f32.mrb[0].mxu0
      %v1162 = vpop.f32.mrb[0].mxu0
      %1163 = vdwg.mxu0
      %v1164 = vadd.f32 %v1039, %v1118
      %v1165 = vadd.f32 %v1040, %v1120
      %v1166 = vadd.f32 %v1041, %v1159
      %v1167 = vld [vmem:[%s192] sm:$0x3f]
      %s1168 = scalar_lea.vmem %s1, 32
      %v1169 = vld [vmem:[%s1168] sm:$0xf]
      %v1171 = vcombine.high %v1167, %v1167
      %v1173 = vunpack.c.l.s4 1983009808
      %v1174 = vunpack.c.0.s8 %v1173
      %v1175 = vlaneseq
      %v1176 = vshrl.u32 %v1175, 7
      %v1177 = vsub.s32 %v1174, %v1176
      %v1178 = vrot.slane %v1167, %v1177
      %v1180 = vunpack.c.l.s4 1983009808
      %v1181 = vunpack.c.0.s8 %v1180
      %v1182 = vlaneseq
      %v1183 = vshrl.u32 %v1182, 7
      %v1184 = vsub.s32 %v1181, %v1183
      %v1185 = vrot.slane %v1171, %v1184
      %v1186 = vcombine.high %v1178, %v1178
      %1187 = vrot.lane.b32.xlu0 %v1178, 90
      %v1188 = vpop.permute.xlu0 %1187
      %1189 = vrot.lane.b32.xlu0 %v1186, 90
      %v1190 = vpop.permute.xlu0 %1189
      %1191 = vrot.lane.b32.xlu0 %v1185, 90
      %v1192 = vpop.permute.xlu0 %1191
      %vm1193 = vcmask 736256
      %v1194 = vsel %vm1193, %v1188, %v1190
      %v1195 = vsel %vm1193, %v1190, %v1192
      %v1197 = vsel %vm229, %v1169, 0
      %v1200 = vsel %vm233, %v1194, 0
      %v1203 = vsel %vm233, %v1195, 0
      %v1206 = vsel %vm233, %v1192, 0
      %1208 = vmatprep.subr.bf16.mxu0 %v1203
      %1209 = vmatpush1.bf16.msra.mxu0 %v1200
      %1210 = vmatprep.subr.bf16.mxu0 0
      %1211 = vmatpush1.bf16.msra.mxu0 0
      %1212 = vmatprep.subr.bf16.mxu0 0
      %1213 = vmatpush1.bf16.msra.mxu0 0
      %1214 = vmatprep.subr.bf16.mxu0 0
      %1215 = vmatpush1.bf16.msra.mxu0 0
      %1216 = vmatprep.subr.bf16.mxu0 0
      %1217 = vmatpush1.bf16.msra.mxu0 0
      %1218 = vmatprep.subr.bf16.mxu0 0
      %1219 = vmatpush1.bf16.msra.mxu0 0
      %1220 = vmatprep.subr.bf16.mxu0 0
      %1221 = vmatpush1.bf16.msra.mxu0 0
      %1222 = vmatprep.subr.bf16.mxu0 0
      %1223 = vmatpush1.bf16.msra.mxu0 0
      %1224 = vmatprep.subr.bf16.mxu0 0
      %1225 = vmatpush1.bf16.msra.mxu0 0
      %1226 = vmatprep.subr.bf16.mxu0 0
      %1227 = vmatpush1.bf16.msra.mxu0 0
      %1228 = vmatprep.subr.bf16.mxu0 0
      %1229 = vmatpush1.bf16.msra.mxu0 0
      %1230 = vmatprep.subr.bf16.mxu0 0
      %1231 = vmatpush1.bf16.msra.mxu0 0
      %1232 = vmatprep.subr.bf16.mxu0 0
      %1233 = vmatpush1.bf16.msra.mxu0 0
      %1234 = vmatprep.subr.bf16.mxu0 0
      %1235 = vmatpush1.bf16.msra.mxu0 0
      %1236 = vmatprep.subr.bf16.mxu0 0
      %1237 = vmatpush1.bf16.msra.mxu0 0
      %1238 = vmatprep.subr.bf16.mxu0 0
      %1239 = vmatpush1.bf16.msra.mxu0 0
      %1240 = vmatprep.mubr.bf16.mxu0 0
      %1241 = vmatmul.mubr.bf16.gmra.mrb[0].mxu0 %v1197
      %v1242 = vpop.f32.mrb[0].mxu0
      %v1243 = vadd.f32 0.0, %v1242
      %v1244 = vpop.f32.mrb[0].mxu0
      %v1245 = vadd.f32 0.0, %v1244
      %v1246 = vpop.f32.mrb[0].mxu0
      %v1247 = vpop.f32.mrb[0].mxu0
      %1248 = vdwg.mxu0
      %1249 = vmatprep.subr.bf16.mxu0 0
      %1250 = vmatpush1.bf16.msra.mxu0 %v1206
      %1251 = vmatprep.subr.bf16.mxu0 0
      %1252 = vmatpush1.bf16.msra.mxu0 0
      %1253 = vmatprep.subr.bf16.mxu0 0
      %1254 = vmatpush1.bf16.msra.mxu0 0
      %1255 = vmatprep.subr.bf16.mxu0 0
      %1256 = vmatpush1.bf16.msra.mxu0 0
      %1257 = vmatprep.subr.bf16.mxu0 0
      %1258 = vmatpush1.bf16.msra.mxu0 0
      %1259 = vmatprep.subr.bf16.mxu0 0
      %1260 = vmatpush1.bf16.msra.mxu0 0
      %1261 = vmatprep.subr.bf16.mxu0 0
      %1262 = vmatpush1.bf16.msra.mxu0 0
      %1263 = vmatprep.subr.bf16.mxu0 0
      %1264 = vmatpush1.bf16.msra.mxu0 0
      %1265 = vmatprep.subr.bf16.mxu0 0
      %1266 = vmatpush1.bf16.msra.mxu0 0
      %1267 = vmatprep.subr.bf16.mxu0 0
      %1268 = vmatpush1.bf16.msra.mxu0 0
      %1269 = vmatprep.subr.bf16.mxu0 0
      %1270 = vmatpush1.bf16.msra.mxu0 0
      %1271 = vmatprep.subr.bf16.mxu0 0
      %1272 = vmatpush1.bf16.msra.mxu0 0
      %1273 = vmatprep.subr.bf16.mxu0 0
      %1274 = vmatpush1.bf16.msra.mxu0 0
      %1275 = vmatprep.subr.bf16.mxu0 0
      %1276 = vmatpush1.bf16.msra.mxu0 0
      %1277 = vmatprep.subr.bf16.mxu0 0
      %1278 = vmatpush1.bf16.msra.mxu0 0
      %1279 = vmatprep.subr.bf16.mxu0 0
      %1280 = vmatpush1.bf16.msra.mxu0 0
      %1281 = vmatprep.mubr.bf16.mxu0 0
      %1282 = vmatmul.mubr.bf16.gmra.mrb[0].mxu0 %v1197
      %v1283 = vpop.f32.mrb[0].mxu0
      %v1284 = vadd.f32 0.0, %v1283
      %v1285 = vpop.f32.mrb[0].mxu0
      %v1286 = vpop.f32.mrb[0].mxu0
      %v1287 = vpop.f32.mrb[0].mxu0
      %1288 = vdwg.mxu0
      %v1289 = vadd.f32 %v1164, %v1243
      %v1290 = vadd.f32 %v1165, %v1245
      %v1291 = vadd.f32 %v1166, %v1284
      %v1292 = vld [vmem:[%s2] sm:$0xff]
      %1294 = vset.pattern.permute.xlu0 0
      %1295 = vperm.xlu0 %1294, %v1292
      %v1296 = vpop.permute.xlu0 %1295
      %v1298 = vmul.f32 %v1289, %v1296
      %v1299 = vmul.f32 %v1290, %v1296
      %v1300 = vmul.f32 %v1291, %v1296
      %v1301 = vld [vmem:[%s3] sm:$0xff]
      %1303 = vset.pattern.permute.xlu0 0
      %1304 = vperm.xlu0 %1303, %v1301
      %v1305 = vpop.permute.xlu0 %1304
      %v1307 = vadd.f32 %v1298, %v1305
      %v1308 = vadd.f32 %v1299, %v1305
      %v1309 = vadd.f32 %v1300, %v1305
      %v1310 = vmax.f32 %v1307, 0.0
      %v1311 = vmax.f32 %v1308, 0.0
      %v1312 = vmax.f32 %v1309, 0.0
      %v1313 = vpack.c.bf16 %v1310, %v1310
      %v1314 = vpack.c.bf16 %v1311, %v1311
      %v1315 = vpack.c.bf16 %v1312, %v1312
      %v1319 = vunpack.c.l.b16 %v1313
      %v1320 = vunpack.c.l.b16 %v1314
      %v1321 = vunpack.c.l.b16 %v1315
      %v1322 = vpack.c.b16 %v1320, %v1319
      %v1323 = vpack.c.b16 %v1321, %v1321
      %1326 = vst [vmem:[%s197] sm:$0xff] %v1322
      %vm1327 = vcmask 257024
      %1328 = vst.msk [vmem:[%s197 + $0x8] sm:$0xf] %vm1327, %v1323
      %p1329 = scmp.lt.s32.totalorder %s15, 1
      %s1330 = scalar_select %p1329, %s15, 1
      %s1331 = smul.addr %s1330, 3
      %s1332 = smul.addr %s1331, 4
      %s1333 = scalar_lea.vmem %s4, %s1332
      // Predicated region
      $region37: #{unit_forward.3} parent=35 // pred_check
        %p1334 = pneg %p122
      $region38: #{unit_forward.3} parent=35 // pred_check_branch
        %1336 = sbr.rel (%p1334) target = $region40
      $region39: #{unit_forward.3} parent=35 // pred_region
        _
      $region40: #{unit_forward.3} parent=35 // pred_fallthru
        _
    $region36: #{unit_forward.3} parent=5 // pred_fallthru
      _
    %p1337 = scmp.le.s32.totalorder 2, %s10
    // Predicated region
    $region41: #{unit_forward.3} parent=5 // pred_check
      %p1338 = pneg %p1337
    $region42: #{unit_forward.3} parent=5 // pred_check_branch
      %1340 = sbr.rel (%p1338) target = $region44
    $region43: #{unit_forward.3} parent=5 // pred_region
      %s1341 = ssub.s32 %s10, 2
      // Predicated region
      $region45: #{unit_forward.3} parent=43 // pred_check
        %p1342 = pneg %p128
      $region46: #{unit_forward.3} parent=43 // pred_check_branch
        %1344 = sbr.rel (%p1342) target = $region48
      $region47: #{unit_forward.3} parent=43 // pred_region
        %p1345 = scmp.lt.s32.totalorder %s16, 1
        %s1346 = scalar_select %p1345, %s16, 1
        %s1347 = smul.addr %s1346, 3
        %s1348 = smul.addr %s1347, 4
        %s1349 = scalar_lea.vmem %s4, %s1348
      $region48: #{unit_forward.3} parent=43 // pred_fallthru
        _
    $region44: #{unit_forward.3} parent=5 // pred_fallthru
      _
  $region6: #{unit_forward.3} parent=0 // loop_footer
    %s14 = sadd.s32 1, %s10
  $region7: #{unit_forward.3} parent=0 // loop_footer_branch
    %9 = sbr.rel target = $region3
  $region8: #{unit_forward.3} parent=0 // loop_exit
    _

// kernel: unit_forward.2
$region0: #{unit_forward.2}
  #allocation0 [shape = 'u32[]', space=smem, size = 0x4, offset = 0x4, fixed_abs, tag = 'smem constant byte address 0x4 - core index']
  #allocation1 [shape = 'u32[144,128]{1,0:T(1,128)}', space=vmem, size = 0x12000, scoped, tag = 'internal scratch']
  %s0 = inlined_call_operand.vmem [shape: bf16[2,4,384], index: 0, kind: input, shape index: {}]
  %s1 = inlined_call_operand.vmem [shape: bf16[9,8,4], index: 1, kind: input, shape index: {}]
  %s2 = inlined_call_operand.vmem [shape: f32[1,288], index: 2, kind: input, shape index: {}]
  %s3 = inlined_call_operand.vmem [shape: f32[2,8,2], index: 3, kind: output, shape index: {}]
  %s4 = sld [smem:[#allocation0]]
  $region45: #{unit_forward.2} parent=0
    _
  %s6 = ssub.s32 1, %s4
  %s7 = scalar_select 0, %s6, %s4
  loop: start=0, step=1, limit=4
  $region2: #{unit_forward.2} parent=0 // loop_pre_header
    _
  $region3: #{unit_forward.2} parent=0 // loop_header
    %s9 = sphi 0, %s13
    %p10 = scmp.ge.s32.totalorder %s9, 4
    %s19 = sphi 0, %s21
    %s22 = sphi 0, %s19
    %s23 = sphi 0, %s22
    %s39 = sphi 0, %s23
    %s43 = sphi 0, %s43
    %s45 = sphi 0, %s43
    %s46 = sphi 0, %s45
    %s60 = sphi 0, %s46
    %s64 = sphi 0, %s64
    %s66 = sphi 0, %s64
    %s67 = sphi 0, %s66
    %s81 = sphi 0, %s67
    %s87 = sphi 0, %s89
    %s90 = sphi 0, %s87
    %s91 = sphi 0, %s90
    %s107 = sphi 0, %s91
  $region4: #{unit_forward.2} parent=0 // loop_header_branch
    %12 = sbr.rel (%p10) target = $region8
  $region5: #{unit_forward.2} parent=0 // loop_body
    %s14 = ssub.s32 %s9, 1
    %s15 = ssub.s32 %s9, 2
    %s16 = sadd.s32 %s9, 1
    %s17 = ssub.s32 %s9, %s16
    %p18 = scmp.eq.s32.totalorder %s17, 0
    %s20 = sadd.s32 %s19, 1
    %s21 = scalar_select %p18, %s19, %s20
    %p24 = pneg %p18
    %p25 = scmp.eq.s32.totalorder %s9, 1
    %p26 = por %p24, %p25
    %p27 = scmp.ne.s32.totalorder %s19, %s22
    %p28 = scmp.eq.s32.totalorder %s9, 0
    %p29 = por %p27, %p28
    %p30 = scmp.ne.s32.totalorder %s19, %s22
    %p31 = scmp.eq.s32.totalorder %s14, 1
    %p32 = por %p30, %p31
    %p33 = scmp.ne.s32.totalorder %s22, %s23
    %p34 = scmp.eq.s32.totalorder %s14, 0
    %p35 = por %p33, %p34
    %p36 = scmp.ne.s32.totalorder %s22, %s23
    %p37 = scmp.eq.s32.totalorder %s15, 1
    %p38 = por %p36, %p37
    %p40 = scmp.ne.s32.totalorder %s23, %s39
    %p41 = scmp.eq.s32.totalorder %s15, 0
    %p42 = por %p40, %p41
    %s44 = sadd.s32 %s43, 1
    %p47 = scmp.eq.s32.totalorder %s9, 1
    %p48 = scmp.ne.s32.totalorder %s43, %s45
    %p49 = scmp.eq.s32.totalorder %s9, 0
    %p50 = por %p48, %p49
    %p51 = scmp.ne.s32.totalorder %s43, %s45
    %p52 = scmp.eq.s32.totalorder %s14, 1
    %p53 = por %p51, %p52
    %p54 = scmp.ne.s32.totalorder %s45, %s46
    %p55 = scmp.eq.s32.totalorder %s14, 0
    %p56 = por %p54, %p55
    %p57 = scmp.ne.s32.totalorder %s45, %s46
    %p58 = scmp.eq.s32.totalorder %s15, 1
    %p59 = por %p57, %p58
    %p61 = scmp.ne.s32.totalorder %s46, %s60
    %p62 = scmp.eq.s32.totalorder %s15, 0
    %p63 = por %p61, %p62
    %s65 = sadd.s32 %s64, 1
    %p68 = scmp.eq.s32.totalorder %s9, 1
    %p69 = scmp.ne.s32.totalorder %s64, %s66
    %p70 = scmp.eq.s32.totalorder %s9, 0
    %p71 = por %p69, %p70
    %p72 = scmp.ne.s32.totalorder %s64, %s66
    %p73 = scmp.eq.s32.totalorder %s14, 1
    %p74 = por %p72, %p73
    %p75 = scmp.ne.s32.totalorder %s66, %s67
    %p76 = scmp.eq.s32.totalorder %s14, 0
    %p77 = por %p75, %p76
    %p78 = scmp.ne.s32.totalorder %s66, %s67
    %p79 = scmp.eq.s32.totalorder %s15, 1
    %p80 = por %p78, %p79
    %p82 = scmp.ne.s32.totalorder %s67, %s81
    %p83 = scmp.eq.s32.totalorder %s15, 0
    %p84 = por %p82, %p83
    %s85 = ssub.s32 %s9, %s16
    %p86 = scmp.eq.s32.totalorder %s85, 0
    %s88 = sadd.s32 %s87, 1
    %s89 = scalar_select %p86, %s87, %s88
    %p92 = pneg %p86
    %p93 = scmp.eq.s32.totalorder %s9, 1
    %p94 = por %p92, %p93
    %p95 = scmp.ne.s32.totalorder %s87, %s90
    %p96 = scmp.eq.s32.totalorder %s9, 0
    %p97 = por %p95, %p96
    %p98 = scmp.ne.s32.totalorder %s87, %s90
    %p99 = scmp.eq.s32.totalorder %s14, 1
    %p100 = por %p98, %p99
    %p101 = scmp.ne.s32.totalorder %s90, %s91
    %p102 = scmp.eq.s32.totalorder %s14, 0
    %p103 = por %p101, %p102
    %p104 = scmp.ne.s32.totalorder %s90, %s91
    %p105 = scmp.eq.s32.totalorder %s15, 1
    %p106 = por %p104, %p105
    %p108 = scmp.ne.s32.totalorder %s91, %s107
    %p109 = scmp.eq.s32.totalorder %s15, 0
    %p110 = por %p108, %p109
    %p111 = scmp.le.s32.totalorder 1, %s9
    %p112 = scmp.lt.s32.totalorder %s9, 3
    %p113 = pnand %p111, %p112
    %p114 = pneg %p113
    // Predicated region
    $region9: #{unit_forward.2} parent=5 // pred_check
      _
    $region10: #{unit_forward.2} parent=5 // pred_check_branch
      %116 = sbr.rel (%p113) target = $region12
    $region11: #{unit_forward.2} parent=5 // pred_region
      %s117 = ssub.s32 %s9, 1
      // Predicated region
      $region13: #{unit_forward.2} parent=11 // pred_check
        %p118 = pneg %p56
      $region14: #{unit_forward.2} parent=11 // pred_check_branch
        %120 = sbr.rel (%p118) target = $region16
      $region15: #{unit_forward.2} parent=11 // pred_region
        _
      $region16: #{unit_forward.2} parent=11 // pred_fallthru
        _
      // Predicated region
      $region17: #{unit_forward.2} parent=11 // pred_check
        %p121 = pneg %p77
      $region18: #{unit_forward.2} parent=11 // pred_check_branch
        %123 = sbr.rel (%p121) target = $region20
      $region19: #{unit_forward.2} parent=11 // pred_region
        _
      $region20: #{unit_forward.2} parent=11 // pred_fallthru
        _
    $region12: #{unit_forward.2} parent=5 // pred_fallthru
      _
    %p124 = scmp.lt.s32.totalorder %s9, 2
    // Predicated region
    $region21: #{unit_forward.2} parent=5 // pred_check
      %p125 = pneg %p124
    $region22: #{unit_forward.2} parent=5 // pred_check_branch
      %127 = sbr.rel (%p125) target = $region24
    $region23: #{unit_forward.2} parent=5 // pred_region
      // Predicated region
      $region25: #{unit_forward.2} parent=23 // pred_check
        %p128 = pneg %p29
      $region26: #{unit_forward.2} parent=23 // pred_check_branch
        %130 = sbr.rel (%p128) target = $region28
      $region27: #{unit_forward.2} parent=23 // pred_region
        %p131 = scmp.lt.s32.totalorder %s9, 1
        %s132 = scalar_select %p131, %s9, 1
        %s133 = smul.addr %s132, 3
        %s134 = smul.addr %s133, 2
        %s135 = scalar_lea.vmem %s0, %s134
      $region28: #{unit_forward.2} parent=23 // pred_fallthru
        _
    $region24: #{unit_forward.2} parent=5 // pred_fallthru
      _
    %p136 = scmp.le.s32.totalorder 1, %s9
    %p137 = scmp.lt.s32.totalorder %s9, 3
    %p138 = pnand %p136, %p137
    %p139 = pneg %p138
    // Predicated region
    $region29: #{unit_forward.2} parent=5 // pred_check
      _
    $region30: #{unit_forward.2} parent=5 // pred_check_branch
      %141 = sbr.rel (%p138) target = $region32
    $region31: #{unit_forward.2} parent=5 // pred_region
      %s142 = ssub.s32 %s9, 1
      %p143 = scmp.lt.s32.totalorder %s14, 1
      %s144 = scalar_select %p143, %s14, 1
      %s145 = smul.addr %s144, 3
      %s146 = smul.addr %s145, 2
      %s147 = scalar_lea.vmem %s0, %s146
      %p148 = pneg %p35
      %p149 = pneg %p32
      %p150 = pneg %p56
      %p151 = pneg %p53
      %p152 = pneg %p77
      %p153 = pneg %p74
      %p154 = pneg %p103
      %p155 = pneg %p100
      %p156 = scmp.lt.s32.totalorder %s14, 1
      %s157 = scalar_select %p156, %s14, 1
      %s158 = smul.addr %s157, 8
      %s159 = scalar_lea.vmem %s3, %s158
      %p160 = scmp.lt.s32.totalorder %s14, 1
      %s161 = scalar_select %p160, %s14, 1
      %s162 = smul.addr %s161, 3
      %s163 = smul.addr %s162, 2
      %s164 = scalar_lea.vmem %s0, %s163
      %p165 = scmp.lt.s32.totalorder %s14, 1
      %s166 = scalar_select %p165, %s14, 1
      %s167 = smul.addr %s166, 8
      %s168 = scalar_lea.vmem %s3, %s167
      %v170 = vld [vmem:[%s164] sm:$0x3f]
      %v171 = vld [vmem:[%s1] sm:$0xf]
      %s172 = scalar_lea.vmem %s1, 4
      %v173 = vld [vmem:[%s172] sm:$0xf]
      %v175 = vcombine.high %v170, %v170
      %v177 = vunpack.c.l.s4 1983009808
      %v178 = vunpack.c.0.s8 %v177
      %v179 = vlaneseq
      %v180 = vshrl.u32 %v179, 7
      %v181 = vsub.s32 %v178, %v180
      %v182 = vrot.slane %v170, %v181
      %v184 = vunpack.c.l.s4 1983009808
      %v185 = vunpack.c.0.s8 %v184
      %v186 = vlaneseq
      %v187 = vshrl.u32 %v186, 7
      %v188 = vsub.s32 %v185, %v187
      %v189 = vrot.slane %v175, %v188
      %v190 = vcombine.high %v182, %v182
      %191 = vrot.lane.b32.xlu0 %v182, 127
      %v192 = vpop.permute.xlu0 %191
      %193 = vrot.lane.b32.xlu0 %v190, 127
      %v194 = vpop.permute.xlu0 %193
      %195 = vrot.lane.b32.xlu0 %v189, 127
      %v196 = vpop.permute.xlu0 %195
      %vm197 = vcmask 1039360
      %v198 = vsel %vm197, %v192, %v194
      %v199 = vsel %vm197, %v194, %v196
      %vm200 = vcmask 31744
      %v202 = vsel %vm200, %v173, 0
      %vm204 = vcmask 1041408
      %v206 = vsel %vm204, %v198, 0
      %v209 = vsel %vm204, %v199, 0
      %v212 = vsel %vm204, %v196, 0
      %214 = vmatprep.subr.bf16.mxu0 %v209
      %215 = vmatpush1.bf16.msra.mxu0 %v206
      %216 = vmatprep.subr.bf16.mxu0 0
      %217 = vmatpush1.bf16.msra.mxu0 0
      %218 = vmatprep.subr.bf16.mxu0 0
      %219 = vmatpush1.bf16.msra.mxu0 0
      %220 = vmatprep.subr.bf16.mxu0 0
      %221 = vmatpush1.bf16.msra.mxu0 0
      %222 = vmatprep.subr.bf16.mxu0 0
      %223 = vmatpush1.bf16.msra.mxu0 0
      %224 = vmatprep.subr.bf16.mxu0 0
      %225 = vmatpush1.bf16.msra.mxu0 0
      %226 = vmatprep.subr.bf16.mxu0 0
      %227 = vmatpush1.bf16.msra.mxu0 0
      %228 = vmatprep.subr.bf16.mxu0 0
      %229 = vmatpush1.bf16.msra.mxu0 0
      %230 = vmatprep.subr.bf16.mxu0 0
      %231 = vmatpush1.bf16.msra.mxu0 0
      %232 = vmatprep.subr.bf16.mxu0 0
      %233 = vmatpush1.bf16.msra.mxu0 0
      %234 = vmatprep.subr.bf16.mxu0 0
      %235 = vmatpush1.bf16.msra.mxu0 0
      %236 = vmatprep.subr.bf16.mxu0 0
      %237 = vmatpush1.bf16.msra.mxu0 0
      %238 = vmatprep.subr.bf16.mxu0 0
      %239 = vmatpush1.bf16.msra.mxu0 0
      %240 = vmatprep.subr.bf16.mxu0 0
      %241 = vmatpush1.bf16.msra.mxu0 0
      %242 = vmatprep.subr.bf16.mxu0 0
      %243 = vmatpush1.bf16.msra.mxu0 0
      %244 = vmatprep.subr.bf16.mxu0 0
      %245 = vmatpush1.bf16.msra.mxu0 0
      %246 = vmatprep.mubr.bf16.mxu0 0
      %247 = vmatmul.mubr.bf16.gmra.mrb[0].mxu0 %v202
      %v248 = vpop.f32.mrb[0].mxu0
      %v249 = vadd.f32 0.0, %v248
      %v250 = vpop.f32.mrb[0].mxu0
      %v251 = vadd.f32 0.0, %v250
      %v252 = vpop.f32.mrb[0].mxu0
      %v253 = vpop.f32.mrb[0].mxu0
      %254 = vdwg.mxu0
      %255 = vmatprep.subr.bf16.mxu0 0
      %256 = vmatpush1.bf16.msra.mxu0 %v212
      %257 = vmatprep.subr.bf16.mxu0 0
      %258 = vmatpush1.bf16.msra.mxu0 0
      %259 = vmatprep.subr.bf16.mxu0 0
      %260 = vmatpush1.bf16.msra.mxu0 0
      %261 = vmatprep.subr.bf16.mxu0 0
      %262 = vmatpush1.bf16.msra.mxu0 0
      %263 = vmatprep.subr.bf16.mxu0 0
      %264 = vmatpush1.bf16.msra.mxu0 0
      %265 = vmatprep.subr.bf16.mxu0 0
      %266 = vmatpush1.bf16.msra.mxu0 0
      %267 = vmatprep.subr.bf16.mxu0 0
      %268 = vmatpush1.bf16.msra.mxu0 0
      %269 = vmatprep.subr.bf16.mxu0 0
      %270 = vmatpush1.bf16.msra.mxu0 0
      %271 = vmatprep.subr.bf16.mxu0 0
      %272 = vmatpush1.bf16.msra.mxu0 0
      %273 = vmatprep.subr.bf16.mxu0 0
      %274 = vmatpush1.bf16.msra.mxu0 0
      %275 = vmatprep.subr.bf16.mxu0 0
      %276 = vmatpush1.bf16.msra.mxu0 0
      %277 = vmatprep.subr.bf16.mxu0 0
      %278 = vmatpush1.bf16.msra.mxu0 0
      %279 = vmatprep.subr.bf16.mxu0 0
      %280 = vmatpush1.bf16.msra.mxu0 0
      %281 = vmatprep.subr.bf16.mxu0 0
      %282 = vmatpush1.bf16.msra.mxu0 0
      %283 = vmatprep.subr.bf16.mxu0 0
      %284 = vmatpush1.bf16.msra.mxu0 0
      %285 = vmatprep.subr.bf16.mxu0 0
      %286 = vmatpush1.bf16.msra.mxu0 0
      %287 = vmatprep.mubr.bf16.mxu0 0
      %288 = vmatmul.mubr.bf16.gmra.mrb[0].mxu0 %v202
      %v289 = vpop.f32.mrb[0].mxu0
      %v290 = vadd.f32 0.0, %v289
      %v291 = vpop.f32.mrb[0].mxu0
      %v292 = vpop.f32.mrb[0].mxu0
      %v293 = vpop.f32.mrb[0].mxu0
      %294 = vdwg.mxu0
      %v296 = vsel %vm200, %v171, 0
      %v299 = vsel %vm204, %v182, 0
      %v302 = vsel %vm204, %v190, 0
      %v305 = vsel %vm204, %v189, 0
      %307 = vmatprep.subr.bf16.mxu0 %v302
      %308 = vmatpush1.bf16.msra.mxu0 %v299
      %309 = vmatprep.subr.bf16.mxu0 0
      %310 = vmatpush1.bf16.msra.mxu0 0
      %311 = vmatprep.subr.bf16.mxu0 0
      %312 = vmatpush1.bf16.msra.mxu0 0
      %313 = vmatprep.subr.bf16.mxu0 0
      %314 = vmatpush1.bf16.msra.mxu0 0
      %315 = vmatprep.subr.bf16.mxu0 0
      %316 = vmatpush1.bf16.msra.mxu0 0
      %317 = vmatprep.subr.bf16.mxu0 0
      %318 = vmatpush1.bf16.msra.mxu0 0
      %319 = vmatprep.subr.bf16.mxu0 0
      %320 = vmatpush1.bf16.msra.mxu0 0
      %321 = vmatprep.subr.bf16.mxu0 0
      %322 = vmatpush1.bf16.msra.mxu0 0
      %323 = vmatprep.subr.bf16.mxu0 0
      %324 = vmatpush1.bf16.msra.mxu0 0
      %325 = vmatprep.subr.bf16.mxu0 0
      %326 = vmatpush1.bf16.msra.mxu0 0
      %327 = vmatprep.subr.bf16.mxu0 0
      %328 = vmatpush1.bf16.msra.mxu0 0
      %329 = vmatprep.subr.bf16.mxu0 0
      %330 = vmatpush1.bf16.msra.mxu0 0
      %331 = vmatprep.subr.bf16.mxu0 0
      %332 = vmatpush1.bf16.msra.mxu0 0
      %333 = vmatprep.subr.bf16.mxu0 0
      %334 = vmatpush1.bf16.msra.mxu0 0
      %335 = vmatprep.subr.bf16.mxu0 0
      %336 = vmatpush1.bf16.msra.mxu0 0
      %337 = vmatprep.subr.bf16.mxu0 0
      %338 = vmatpush1.bf16.msra.mxu0 0
      %339 = vmatprep.mubr.bf16.mxu0 0
      %340 = vmatmul.mubr.bf16.gmra.mrb[0].mxu0 %v296
      %v341 = vpop.f32.mrb[0].mxu0
      %v342 = vadd.f32 %v249, %v341
      %v343 = vpop.f32.mrb[0].mxu0
      %v344 = vadd.f32 %v251, %v343
      %v345 = vpop.f32.mrb[0].mxu0
      %v346 = vpop.f32.mrb[0].mxu0
      %347 = vdwg.mxu0
      %348 = vmatprep.subr.bf16.mxu0 0
      %349 = vmatpush1.bf16.msra.mxu0 %v305
      %350 = vmatprep.subr.bf16.mxu0 0
      %351 = vmatpush1.bf16.msra.mxu0 0
      %352 = vmatprep.subr.bf16.mxu0 0
      %353 = vmatpush1.bf16.msra.mxu0 0
      %354 = vmatprep.subr.bf16.mxu0 0
      %355 = vmatpush1.bf16.msra.mxu0 0
      %356 = vmatprep.subr.bf16.mxu0 0
      %357 = vmatpush1.bf16.msra.mxu0 0
      %358 = vmatprep.subr.bf16.mxu0 0
      %359 = vmatpush1.bf16.msra.mxu0 0
      %360 = vmatprep.subr.bf16.mxu0 0
      %361 = vmatpush1.bf16.msra.mxu0 0
      %362 = vmatprep.subr.bf16.mxu0 0
      %363 = vmatpush1.bf16.msra.mxu0 0
      %364 = vmatprep.subr.bf16.mxu0 0
      %365 = vmatpush1.bf16.msra.mxu0 0
      %366 = vmatprep.subr.bf16.mxu0 0
      %367 = vmatpush1.bf16.msra.mxu0 0
      %368 = vmatprep.subr.bf16.mxu0 0
      %369 = vmatpush1.bf16.msra.mxu0 0
      %370 = vmatprep.subr.bf16.mxu0 0
      %371 = vmatpush1.bf16.msra.mxu0 0
      %372 = vmatprep.subr.bf16.mxu0 0
      %373 = vmatpush1.bf16.msra.mxu0 0
      %374 = vmatprep.subr.bf16.mxu0 0
      %375 = vmatpush1.bf16.msra.mxu0 0
      %376 = vmatprep.subr.bf16.mxu0 0
      %377 = vmatpush1.bf16.msra.mxu0 0
      %378 = vmatprep.subr.bf16.mxu0 0
      %379 = vmatpush1.bf16.msra.mxu0 0
      %380 = vmatprep.mubr.bf16.mxu0 0
      %381 = vmatmul.mubr.bf16.gmra.mrb[0].mxu0 %v296
      %v382 = vpop.f32.mrb[0].mxu0
      %v383 = vadd.f32 %v290, %v382
      %v384 = vpop.f32.mrb[0].mxu0
      %v385 = vpop.f32.mrb[0].mxu0
      %v386 = vpop.f32.mrb[0].mxu0
      %387 = vdwg.mxu0
      %v388 = vld [vmem:[%s164] sm:$0x3f]
      %s389 = scalar_lea.vmem %s1, 8
      %v390 = vld [vmem:[%s389] sm:$0xf]
      %v392 = vcombine.high %v388, %v388
      %v394 = vunpack.c.l.s4 1983009808
      %v395 = vunpack.c.0.s8 %v394
      %v396 = vlaneseq
      %v397 = vshrl.u32 %v396, 7
      %v398 = vsub.s32 %v395, %v397
      %v399 = vrot.slane %v388, %v398
      %v401 = vunpack.c.l.s4 1983009808
      %v402 = vunpack.c.0.s8 %v401
      %v403 = vlaneseq
      %v404 = vshrl.u32 %v403, 7
      %v405 = vsub.s32 %v402, %v404
      %v406 = vrot.slane %v392, %v405
      %v407 = vcombine.high %v399, %v399
      %408 = vrot.lane.b32.xlu0 %v399, 126
      %v409 = vpop.permute.xlu0 %408
      %410 = vrot.lane.b32.xlu0 %v407, 126
      %v411 = vpop.permute.xlu0 %410
      %412 = vrot.lane.b32.xlu0 %v406, 126
      %v413 = vpop.permute.xlu0 %412
      %vm414 = vcmask 1031168
      %v415 = vsel %vm414, %v409, %v411
      %v416 = vsel %vm414, %v411, %v413
      %v418 = vsel %vm200, %v390, 0
      %v421 = vsel %vm204, %v415, 0
      %v424 = vsel %vm204, %v416, 0
      %v427 = vsel %vm204, %v413, 0
      %429 = vmatprep.subr.bf16.mxu0 %v424
      %430 = vmatpush1.bf16.msra.mxu0 %v421
      %431 = vmatprep.subr.bf16.mxu0 0
      %432 = vmatpush1.bf16.msra.mxu0 0
      %433 = vmatprep.subr.bf16.mxu0 0
      %434 = vmatpush1.bf16.msra.mxu0 0
      %435 = vmatprep.subr.bf16.mxu0 0
      %436 = vmatpush1.bf16.msra.mxu0 0
      %437 = vmatprep.subr.bf16.mxu0 0
      %438 = vmatpush1.bf16.msra.mxu0 0
      %439 = vmatprep.subr.bf16.mxu0 0
      %440 = vmatpush1.bf16.msra.mxu0 0
      %441 = vmatprep.subr.bf16.mxu0 0
      %442 = vmatpush1.bf16.msra.mxu0 0
      %443 = vmatprep.subr.bf16.mxu0 0
      %444 = vmatpush1.bf16.msra.mxu0 0
      %445 = vmatprep.subr.bf16.mxu0 0
      %446 = vmatpush1.bf16.msra.mxu0 0
      %447 = vmatprep.subr.bf16.mxu0 0
      %448 = vmatpush1.bf16.msra.mxu0 0
      %449 = vmatprep.subr.bf16.mxu0 0
      %450 = vmatpush1.bf16.msra.mxu0 0
      %451 = vmatprep.subr.bf16.mxu0 0
      %452 = vmatpush1.bf16.msra.mxu0 0
      %453 = vmatprep.subr.bf16.mxu0 0
      %454 = vmatpush1.bf16.msra.mxu0 0
      %455 = vmatprep.subr.bf16.mxu0 0
      %456 = vmatpush1.bf16.msra.mxu0 0
      %457 = vmatprep.subr.bf16.mxu0 0
      %458 = vmatpush1.bf16.msra.mxu0 0
      %459 = vmatprep.subr.bf16.mxu0 0
      %460 = vmatpush1.bf16.msra.mxu0 0
      %461 = vmatprep.mubr.bf16.mxu0 0
      %462 = vmatmul.mubr.bf16.gmra.mrb[0].mxu0 %v418
      %v463 = vpop.f32.mrb[0].mxu0
      %v464 = vadd.f32 0.0, %v463
      %v465 = vpop.f32.mrb[0].mxu0
      %v466 = vadd.f32 0.0, %v465
      %v467 = vpop.f32.mrb[0].mxu0
      %v468 = vpop.f32.mrb[0].mxu0
      %469 = vdwg.mxu0
      %470 = vmatprep.subr.bf16.mxu0 0
      %471 = vmatpush1.bf16.msra.mxu0 %v427
      %472 = vmatprep.subr.bf16.mxu0 0
      %473 = vmatpush1.bf16.msra.mxu0 0
      %474 = vmatprep.subr.bf16.mxu0 0
      %475 = vmatpush1.bf16.msra.mxu0 0
      %476 = vmatprep.subr.bf16.mxu0 0
      %477 = vmatpush1.bf16.msra.mxu0 0
      %478 = vmatprep.subr.bf16.mxu0 0
      %479 = vmatpush1.bf16.msra.mxu0 0
      %480 = vmatprep.subr.bf16.mxu0 0
      %481 = vmatpush1.bf16.msra.mxu0 0
      %482 = vmatprep.subr.bf16.mxu0 0
      %483 = vmatpush1.bf16.msra.mxu0 0
      %484 = vmatprep.subr.bf16.mxu0 0
      %485 = vmatpush1.bf16.msra.mxu0 0
      %486 = vmatprep.subr.bf16.mxu0 0
      %487 = vmatpush1.bf16.msra.mxu0 0
      %488 = vmatprep.subr.bf16.mxu0 0
      %489 = vmatpush1.bf16.msra.mxu0 0
      %490 = vmatprep.subr.bf16.mxu0 0
      %491 = vmatpush1.bf16.msra.mxu0 0
      %492 = vmatprep.subr.bf16.mxu0 0
      %493 = vmatpush1.bf16.msra.mxu0 0
      %494 = vmatprep.subr.bf16.mxu0 0
      %495 = vmatpush1.bf16.msra.mxu0 0
      %496 = vmatprep.subr.bf16.mxu0 0
      %497 = vmatpush1.bf16.msra.mxu0 0
      %498 = vmatprep.subr.bf16.mxu0 0
      %499 = vmatpush1.bf16.msra.mxu0 0
      %500 = vmatprep.subr.bf16.mxu0 0
      %501 = vmatpush1.bf16.msra.mxu0 0
      %502 = vmatprep.mubr.bf16.mxu0 0
      %503 = vmatmul.mubr.bf16.gmra.mrb[0].mxu0 %v418
      %v504 = vpop.f32.mrb[0].mxu0
      %v505 = vadd.f32 0.0, %v504
      %v506 = vpop.f32.mrb[0].mxu0
      %v507 = vpop.f32.mrb[0].mxu0
      %v508 = vpop.f32.mrb[0].mxu0
      %509 = vdwg.mxu0
      %v510 = vadd.f32 %v342, %v464
      %v511 = vadd.f32 %v344, %v466
      %v512 = vadd.f32 %v383, %v505
      %v513 = vld [vmem:[%s164] sm:$0x3f]
      %s514 = scalar_lea.vmem %s1, 12
      %v515 = vld [vmem:[%s514] sm:$0xf]
      %v517 = vcombine.high %v513, %v513
      %v519 = vunpack.c.l.s4 1983009808
      %v520 = vunpack.c.0.s8 %v519
      %v521 = vlaneseq
      %v522 = vshrl.u32 %v521, 7
      %v523 = vsub.s32 %v520, %v522
      %v524 = vrot.slane %v513, %v523
      %v526 = vunpack.c.l.s4 1983009808
      %v527 = vunpack.c.0.s8 %v526
      %v528 = vlaneseq
      %v529 = vshrl.u32 %v528, 7
      %v530 = vsub.s32 %v527, %v529
      %v531 = vrot.slane %v517, %v530
      %v532 = vcombine.high %v524, %v524
      %533 = vrot.lane.b32.xlu0 %v524, 110
      %v534 = vpop.permute.xlu0 %533
      %535 = vrot.lane.b32.xlu0 %v532, 110
      %v536 = vpop.permute.xlu0 %535
      %537 = vrot.lane.b32.xlu0 %v531, 110
      %v538 = vpop.permute.xlu0 %537
      %vm539 = vcmask 900096
      %v540 = vsel %vm539, %v534, %v536
      %v541 = vsel %vm539, %v536, %v538
      %v543 = vsel %vm200, %v515, 0
      %v546 = vsel %vm204, %v540, 0
      %v549 = vsel %vm204, %v541, 0
      %v552 = vsel %vm204, %v538, 0
      %554 = vmatprep.subr.bf16.mxu0 %v549
      %555 = vmatpush1.bf16.msra.mxu0 %v546
      %556 = vmatprep.subr.bf16.mxu0 0
      %557 = vmatpush1.bf16.msra.mxu0 0
      %558 = vmatprep.subr.bf16.mxu0 0
      %559 = vmatpush1.bf16.msra.mxu0 0
      %560 = vmatprep.subr.bf16.mxu0 0
      %561 = vmatpush1.bf16.msra.mxu0 0
      %562 = vmatprep.subr.bf16.mxu0 0
      %563 = vmatpush1.bf16.msra.mxu0 0
      %564 = vmatprep.subr.bf16.mxu0 0
      %565 = vmatpush1.bf16.msra.mxu0 0
      %566 = vmatprep.subr.bf16.mxu0 0
      %567 = vmatpush1.bf16.msra.mxu0 0
      %568 = vmatprep.subr.bf16.mxu0 0
      %569 = vmatpush1.bf16.msra.mxu0 0
      %570 = vmatprep.subr.bf16.mxu0 0
      %571 = vmatpush1.bf16.msra.mxu0 0
      %572 = vmatprep.subr.bf16.mxu0 0
      %573 = vmatpush1.bf16.msra.mxu0 0
      %574 = vmatprep.subr.bf16.mxu0 0
      %575 = vmatpush1.bf16.msra.mxu0 0
      %576 = vmatprep.subr.bf16.mxu0 0
      %577 = vmatpush1.bf16.msra.mxu0 0
      %578 = vmatprep.subr.bf16.mxu0 0
      %579 = vmatpush1.bf16.msra.mxu0 0
      %580 = vmatprep.subr.bf16.mxu0 0
      %581 = vmatpush1.bf16.msra.mxu0 0
      %582 = vmatprep.subr.bf16.mxu0 0
      %583 = vmatpush1.bf16.msra.mxu0 0
      %584 = vmatprep.subr.bf16.mxu0 0
      %585 = vmatpush1.bf16.msra.mxu0 0
      %586 = vmatprep.mubr.bf16.mxu0 0
      %587 = vmatmul.mubr.bf16.gmra.mrb[0].mxu0 %v543
      %v588 = vpop.f32.mrb[0].mxu0
      %v589 = vadd.f32 0.0, %v588
      %v590 = vpop.f32.mrb[0].mxu0
      %v591 = vadd.f32 0.0, %v590
      %v592 = vpop.f32.mrb[0].mxu0
      %v593 = vpop.f32.mrb[0].mxu0
      %594 = vdwg.mxu0
      %595 = vmatprep.subr.bf16.mxu0 0
      %596 = vmatpush1.bf16.msra.mxu0 %v552
      %597 = vmatprep.subr.bf16.mxu0 0
      %598 = vmatpush1.bf16.msra.mxu0 0
      %599 = vmatprep.subr.bf16.mxu0 0
      %600 = vmatpush1.bf16.msra.mxu0 0
      %601 = vmatprep.subr.bf16.mxu0 0
      %602 = vmatpush1.bf16.msra.mxu0 0
      %603 = vmatprep.subr.bf16.mxu0 0
      %604 = vmatpush1.bf16.msra.mxu0 0
      %605 = vmatprep.subr.bf16.mxu0 0
      %606 = vmatpush1.bf16.msra.mxu0 0
      %607 = vmatprep.subr.bf16.mxu0 0
      %608 = vmatpush1.bf16.msra.mxu0 0
      %609 = vmatprep.subr.bf16.mxu0 0
      %610 = vmatpush1.bf16.msra.mxu0 0
      %611 = vmatprep.subr.bf16.mxu0 0
      %612 = vmatpush1.bf16.msra.mxu0 0
      %613 = vmatprep.subr.bf16.mxu0 0
      %614 = vmatpush1.bf16.msra.mxu0 0
      %615 = vmatprep.subr.bf16.mxu0 0
      %616 = vmatpush1.bf16.msra.mxu0 0
      %617 = vmatprep.subr.bf16.mxu0 0
      %618 = vmatpush1.bf16.msra.mxu0 0
      %619 = vmatprep.subr.bf16.mxu0 0
      %620 = vmatpush1.bf16.msra.mxu0 0
      %621 = vmatprep.subr.bf16.mxu0 0
      %622 = vmatpush1.bf16.msra.mxu0 0
      %623 = vmatprep.subr.bf16.mxu0 0
      %624 = vmatpush1.bf16.msra.mxu0 0
      %625 = vmatprep.subr.bf16.mxu0 0
      %626 = vmatpush1.bf16.msra.mxu0 0
      %627 = vmatprep.mubr.bf16.mxu0 0
      %628 = vmatmul.mubr.bf16.gmra.mrb[0].mxu0 %v543
      %v629 = vpop.f32.mrb[0].mxu0
      %v630 = vadd.f32 0.0, %v629
      %v631 = vpop.f32.mrb[0].mxu0
      %v632 = vpop.f32.mrb[0].mxu0
      %v633 = vpop.f32.mrb[0].mxu0
      %634 = vdwg.mxu0
      %v635 = vadd.f32 %v510, %v589
      %v636 = vadd.f32 %v511, %v591
      %v637 = vadd.f32 %v512, %v630
      %v638 = vld [vmem:[%s164] sm:$0x3f]
      %s639 = scalar_lea.vmem %s1, 16
      %v640 = vld [vmem:[%s639] sm:$0xf]
      %v642 = vcombine.high %v638, %v638
      %v644 = vunpack.c.l.s4 1983009808
      %v645 = vunpack.c.0.s8 %v644
      %v646 = vlaneseq
      %v647 = vshrl.u32 %v646, 7
      %v648 = vsub.s32 %v645, %v647
      %v649 = vrot.slane %v638, %v648
      %v651 = vunpack.c.l.s4 1983009808
      %v652 = vunpack.c.0.s8 %v651
      %v653 = vlaneseq
      %v654 = vshrl.u32 %v653, 7
      %v655 = vsub.s32 %v652, %v654
      %v656 = vrot.slane %v642, %v655
      %v657 = vcombine.high %v649, %v649
      %658 = vrot.lane.b32.xlu0 %v649, 109
      %v659 = vpop.permute.xlu0 %658
      %660 = vrot.lane.b32.xlu0 %v657, 109
      %v661 = vpop.permute.xlu0 %660
      %662 = vrot.lane.b32.xlu0 %v656, 109
      %v663 = vpop.permute.xlu0 %662
      %vm664 = vcmask 891904
      %v665 = vsel %vm664, %v659, %v661
      %v666 = vsel %vm664, %v661, %v663
      %v668 = vsel %vm200, %v640, 0
      %v671 = vsel %vm204, %v665, 0
      %v674 = vsel %vm204, %v666, 0
      %v677 = vsel %vm204, %v663, 0
      %679 = vmatprep.subr.bf16.mxu0 %v674
      %680 = vmatpush1.bf16.msra.mxu0 %v671
      %681 = vmatprep.subr.bf16.mxu0 0
      %682 = vmatpush1.bf16.msra.mxu0 0
      %683 = vmatprep.subr.bf16.mxu0 0
      %684 = vmatpush1.bf16.msra.mxu0 0
      %685 = vmatprep.subr.bf16.mxu0 0
      %686 = vmatpush1.bf16.msra.mxu0 0
      %687 = vmatprep.subr.bf16.mxu0 0
      %688 = vmatpush1.bf16.msra.mxu0 0
      %689 = vmatprep.subr.bf16.mxu0 0
      %690 = vmatpush1.bf16.msra.mxu0 0
      %691 = vmatprep.subr.bf16.mxu0 0
      %692 = vmatpush1.bf16.msra.mxu0 0
      %693 = vmatprep.subr.bf16.mxu0 0
      %694 = vmatpush1.bf16.msra.mxu0 0
      %695 = vmatprep.subr.bf16.mxu0 0
      %696 = vmatpush1.bf16.msra.mxu0 0
      %697 = vmatprep.subr.bf16.mxu0 0
      %698 = vmatpush1.bf16.msra.mxu0 0
      %699 = vmatprep.subr.bf16.mxu0 0
      %700 = vmatpush1.bf16.msra.mxu0 0
      %701 = vmatprep.subr.bf16.mxu0 0
      %702 = vmatpush1.bf16.msra.mxu0 0
      %703 = vmatprep.subr.bf16.mxu0 0
      %704 = vmatpush1.bf16.msra.mxu0 0
      %705 = vmatprep.subr.bf16.mxu0 0
      %706 = vmatpush1.bf16.msra.mxu0 0
      %707 = vmatprep.subr.bf16.mxu0 0
      %708 = vmatpush1.bf16.msra.mxu0 0
      %709 = vmatprep.subr.bf16.mxu0 0
      %710 = vmatpush1.bf16.msra.mxu0 0
      %711 = vmatprep.mubr.bf16.mxu0 0
      %712 = vmatmul.mubr.bf16.gmra.mrb[0].mxu0 %v668
      %v713 = vpop.f32.mrb[0].mxu0
      %v714 = vadd.f32 0.0, %v713
      %v715 = vpop.f32.mrb[0].mxu0
      %v716 = vadd.f32 0.0, %v715
      %v717 = vpop.f32.mrb[0].mxu0
      %v718 = vpop.f32.mrb[0].mxu0
      %719 = vdwg.mxu0
      %720 = vmatprep.subr.bf16.mxu0 0
      %721 = vmatpush1.bf16.msra.mxu0 %v677
      %722 = vmatprep.subr.bf16.mxu0 0
      %723 = vmatpush1.bf16.msra.mxu0 0
      %724 = vmatprep.subr.bf16.mxu0 0
      %725 = vmatpush1.bf16.msra.mxu0 0
      %726 = vmatprep.subr.bf16.mxu0 0
      %727 = vmatpush1.bf16.msra.mxu0 0
      %728 = vmatprep.subr.bf16.mxu0 0
      %729 = vmatpush1.bf16.msra.mxu0 0
      %730 = vmatprep.subr.bf16.mxu0 0
      %731 = vmatpush1.bf16.msra.mxu0 0
      %732 = vmatprep.subr.bf16.mxu0 0
      %733 = vmatpush1.bf16.msra.mxu0 0
      %734 = vmatprep.subr.bf16.mxu0 0
      %735 = vmatpush1.bf16.msra.mxu0 0
      %736 = vmatprep.subr.bf16.mxu0 0
      %737 = vmatpush1.bf16.msra.mxu0 0
      %738 = vmatprep.subr.bf16.mxu0 0
      %739 = vmatpush1.bf16.msra.mxu0 0
      %740 = vmatprep.subr.bf16.mxu0 0
      %741 = vmatpush1.bf16.msra.mxu0 0
      %742 = vmatprep.subr.bf16.mxu0 0
      %743 = vmatpush1.bf16.msra.mxu0 0
      %744 = vmatprep.subr.bf16.mxu0 0
      %745 = vmatpush1.bf16.msra.mxu0 0
      %746 = vmatprep.subr.bf16.mxu0 0
      %747 = vmatpush1.bf16.msra.mxu0 0
      %748 = vmatprep.subr.bf16.mxu0 0
      %749 = vmatpush1.bf16.msra.mxu0 0
      %750 = vmatprep.subr.bf16.mxu0 0
      %751 = vmatpush1.bf16.msra.mxu0 0
      %752 = vmatprep.mubr.bf16.mxu0 0
      %753 = vmatmul.mubr.bf16.gmra.mrb[0].mxu0 %v668
      %v754 = vpop.f32.mrb[0].mxu0
      %v755 = vadd.f32 0.0, %v754
      %v756 = vpop.f32.mrb[0].mxu0
      %v757 = vpop.f32.mrb[0].mxu0
      %v758 = vpop.f32.mrb[0].mxu0
      %759 = vdwg.mxu0
      %v760 = vadd.f32 %v635, %v714
      %v761 = vadd.f32 %v636, %v716
      %v762 = vadd.f32 %v637, %v755
      %v763 = vld [vmem:[%s164] sm:$0x3f]
      %s764 = scalar_lea.vmem %s1, 20
      %v765 = vld [vmem:[%s764] sm:$0xf]
      %v767 = vcombine.high %v763, %v763
      %v769 = vunpack.c.l.s4 1983009808
      %v770 = vunpack.c.0.s8 %v769
      %v771 = vlaneseq
      %v772 = vshrl.u32 %v771, 7
      %v773 = vsub.s32 %v770, %v772
      %v774 = vrot.slane %v763, %v773
      %v776 = vunpack.c.l.s4 1983009808
      %v777 = vunpack.c.0.s8 %v776
      %v778 = vlaneseq
      %v779 = vshrl.u32 %v778, 7
      %v780 = vsub.s32 %v777, %v779
      %v781 = vrot.slane %v767, %v780
      %v782 = vcombine.high %v774, %v774
      %783 = vrot.lane.b32.xlu0 %v774, 108
      %v784 = vpop.permute.xlu0 %783
      %785 = vrot.lane.b32.xlu0 %v782, 108
      %v786 = vpop.permute.xlu0 %785
      %787 = vrot.lane.b32.xlu0 %v781, 108
      %v788 = vpop.permute.xlu0 %787
      %vm789 = vcmask 883712
      %v790 = vsel %vm789, %v784, %v786
      %v791 = vsel %vm789, %v786, %v788
      %v793 = vsel %vm200, %v765, 0
      %v796 = vsel %vm204, %v790, 0
      %v799 = vsel %vm204, %v791, 0
      %v802 = vsel %vm204, %v788, 0
      %804 = vmatprep.subr.bf16.mxu0 %v799
      %805 = vmatpush1.bf16.msra.mxu0 %v796
      %806 = vmatprep.subr.bf16.mxu0 0
      %807 = vmatpush1.bf16.msra.mxu0 0
      %808 = vmatprep.subr.bf16.mxu0 0
      %809 = vmatpush1.bf16.msra.mxu0 0
      %810 = vmatprep.subr.bf16.mxu0 0
      %811 = vmatpush1.bf16.msra.mxu0 0
      %812 = vmatprep.subr.bf16.mxu0 0
      %813 = vmatpush1.bf16.msra.mxu0 0
      %814 = vmatprep.subr.bf16.mxu0 0
      %815 = vmatpush1.bf16.msra.mxu0 0
      %816 = vmatprep.subr.bf16.mxu0 0
      %817 = vmatpush1.bf16.msra.mxu0 0
      %818 = vmatprep.subr.bf16.mxu0 0
      %819 = vmatpush1.bf16.msra.mxu0 0
      %820 = vmatprep.subr.bf16.mxu0 0
      %821 = vmatpush1.bf16.msra.mxu0 0
      %822 = vmatprep.subr.bf16.mxu0 0
      %823 = vmatpush1.bf16.msra.mxu0 0
      %824 = vmatprep.subr.bf16.mxu0 0
      %825 = vmatpush1.bf16.msra.mxu0 0
      %826 = vmatprep.subr.bf16.mxu0 0
      %827 = vmatpush1.bf16.msra.mxu0 0
      %828 = vmatprep.subr.bf16.mxu0 0
      %829 = vmatpush1.bf16.msra.mxu0 0
      %830 = vmatprep.subr.bf16.mxu0 0
      %831 = vmatpush1.bf16.msra.mxu0 0
      %832 = vmatprep.subr.bf16.mxu0 0
      %833 = vmatpush1.bf16.msra.mxu0 0
      %834 = vmatprep.subr.bf16.mxu0 0
      %835 = vmatpush1.bf16.msra.mxu0 0
      %836 = vmatprep.mubr.bf16.mxu0 0
      %837 = vmatmul.mubr.bf16.gmra.mrb[0].mxu0 %v793
      %v838 = vpop.f32.mrb[0].mxu0
      %v839 = vadd.f32 0.0, %v838
      %v840 = vpop.f32.mrb[0].mxu0
      %v841 = vadd.f32 0.0, %v840
      %v842 = vpop.f32.mrb[0].mxu0
      %v843 = vpop.f32.mrb[0].mxu0
      %844 = vdwg.mxu0
      %845 = vmatprep.subr.bf16.mxu0 0
      %846 = vmatpush1.bf16.msra.mxu0 %v802
      %847 = vmatprep.subr.bf16.mxu0 0
      %848 = vmatpush1.bf16.msra.mxu0 0
      %849 = vmatprep.subr.bf16.mxu0 0
      %850 = vmatpush1.bf16.msra.mxu0 0
      %851 = vmatprep.subr.bf16.mxu0 0
      %852 = vmatpush1.bf16.msra.mxu0 0
      %853 = vmatprep.subr.bf16.mxu0 0
      %854 = vmatpush1.bf16.msra.mxu0 0
      %855 = vmatprep.subr.bf16.mxu0 0
      %856 = vmatpush1.bf16.msra.mxu0 0
      %857 = vmatprep.subr.bf16.mxu0 0
      %858 = vmatpush1.bf16.msra.mxu0 0
      %859 = vmatprep.subr.bf16.mxu0 0
      %860 = vmatpush1.bf16.msra.mxu0 0
      %861 = vmatprep.subr.bf16.mxu0 0
      %862 = vmatpush1.bf16.msra.mxu0 0
      %863 = vmatprep.subr.bf16.mxu0 0
      %864 = vmatpush1.bf16.msra.mxu0 0
      %865 = vmatprep.subr.bf16.mxu0 0
      %866 = vmatpush1.bf16.msra.mxu0 0
      %867 = vmatprep.subr.bf16.mxu0 0
      %868 = vmatpush1.bf16.msra.mxu0 0
      %869 = vmatprep.subr.bf16.mxu0 0
      %870 = vmatpush1.bf16.msra.mxu0 0
      %871 = vmatprep.subr.bf16.mxu0 0
      %872 = vmatpush1.bf16.msra.mxu0 0
      %873 = vmatprep.subr.bf16.mxu0 0
      %874 = vmatpush1.bf16.msra.mxu0 0
      %875 = vmatprep.subr.bf16.mxu0 0
      %876 = vmatpush1.bf16.msra.mxu0 0
      %877 = vmatprep.mubr.bf16.mxu0 0
      %878 = vmatmul.mubr.bf16.gmra.mrb[0].mxu0 %v793
      %v879 = vpop.f32.mrb[0].mxu0
      %v880 = vadd.f32 0.0, %v879
      %v881 = vpop.f32.mrb[0].mxu0
      %v882 = vpop.f32.mrb[0].mxu0
      %v883 = vpop.f32.mrb[0].mxu0
      %884 = vdwg.mxu0
      %v885 = vadd.f32 %v760, %v839
      %v886 = vadd.f32 %v761, %v841
      %v887 = vadd.f32 %v762, %v880
      %v888 = vld [vmem:[%s164] sm:$0x3f]
      %s889 = scalar_lea.vmem %s1, 24
      %v890 = vld [vmem:[%s889] sm:$0xf]
      %v892 = vcombine.high %v888, %v888
      %v894 = vunpack.c.l.s4 1983009808
      %v895 = vunpack.c.0.s8 %v894
      %v896 = vlaneseq
      %v897 = vshrl.u32 %v896, 7
      %v898 = vsub.s32 %v895, %v897
      %v899 = vrot.slane %v888, %v898
      %v901 = vunpack.c.l.s4 1983009808
      %v902 = vunpack.c.0.s8 %v901
      %v903 = vlaneseq
      %v904 = vshrl.u32 %v903, 7
      %v905 = vsub.s32 %v902, %v904
      %v906 = vrot.slane %v892, %v905
      %v907 = vcombine.high %v899, %v899
      %908 = vrot.lane.b32.xlu0 %v899, 92
      %v909 = vpop.permute.xlu0 %908
      %910 = vrot.lane.b32.xlu0 %v907, 92
      %v911 = vpop.permute.xlu0 %910
      %912 = vrot.lane.b32.xlu0 %v906, 92
      %v913 = vpop.permute.xlu0 %912
      %vm914 = vcmask 752640
      %v915 = vsel %vm914, %v909, %v911
      %v916 = vsel %vm914, %v911, %v913
      %v918 = vsel %vm200, %v890, 0
      %v921 = vsel %vm204, %v915, 0
      %v924 = vsel %vm204, %v916, 0
      %v927 = vsel %vm204, %v913, 0
      %929 = vmatprep.subr.bf16.mxu0 %v924
      %930 = vmatpush1.bf16.msra.mxu0 %v921
      %931 = vmatprep.subr.bf16.mxu0 0
      %932 = vmatpush1.bf16.msra.mxu0 0
      %933 = vmatprep.subr.bf16.mxu0 0
      %934 = vmatpush1.bf16.msra.mxu0 0
      %935 = vmatprep.subr.bf16.mxu0 0
      %936 = vmatpush1.bf16.msra.mxu0 0
      %937 = vmatprep.subr.bf16.mxu0 0
      %938 = vmatpush1.bf16.msra.mxu0 0
      %939 = vmatprep.subr.bf16.mxu0 0
      %940 = vmatpush1.bf16.msra.mxu0 0
      %941 = vmatprep.subr.bf16.mxu0 0
      %942 = vmatpush1.bf16.msra.mxu0 0
      %943 = vmatprep.subr.bf16.mxu0 0
      %944 = vmatpush1.bf16.msra.mxu0 0
      %945 = vmatprep.subr.bf16.mxu0 0
      %946 = vmatpush1.bf16.msra.mxu0 0
      %947 = vmatprep.subr.bf16.mxu0 0
      %948 = vmatpush1.bf16.msra.mxu0 0
      %949 = vmatprep.subr.bf16.mxu0 0
      %950 = vmatpush1.bf16.msra.mxu0 0
      %951 = vmatprep.subr.bf16.mxu0 0
      %952 = vmatpush1.bf16.msra.mxu0 0
      %953 = vmatprep.subr.bf16.mxu0 0
      %954 = vmatpush1.bf16.msra.mxu0 0
      %955 = vmatprep.subr.bf16.mxu0 0
      %956 = vmatpush1.bf16.msra.mxu0 0
      %957 = vmatprep.subr.bf16.mxu0 0
      %958 = vmatpush1.bf16.msra.mxu0 0
      %959 = vmatprep.subr.bf16.mxu0 0
      %960 = vmatpush1.bf16.msra.mxu0 0
      %961 = vmatprep.mubr.bf16.mxu0 0
      %962 = vmatmul.mubr.bf16.gmra.mrb[0].mxu0 %v918
      %v963 = vpop.f32.mrb[0].mxu0
      %v964 = vadd.f32 0.0, %v963
      %v965 = vpop.f32.mrb[0].mxu0
      %v966 = vadd.f32 0.0, %v965
      %v967 = vpop.f32.mrb[0].mxu0
      %v968 = vpop.f32.mrb[0].mxu0
      %969 = vdwg.mxu0
      %970 = vmatprep.subr.bf16.mxu0 0
      %971 = vmatpush1.bf16.msra.mxu0 %v927
      %972 = vmatprep.subr.bf16.mxu0 0
      %973 = vmatpush1.bf16.msra.mxu0 0
      %974 = vmatprep.subr.bf16.mxu0 0
      %975 = vmatpush1.bf16.msra.mxu0 0
      %976 = vmatprep.subr.bf16.mxu0 0
      %977 = vmatpush1.bf16.msra.mxu0 0
      %978 = vmatprep.subr.bf16.mxu0 0
      %979 = vmatpush1.bf16.msra.mxu0 0
      %980 = vmatprep.subr.bf16.mxu0 0
      %981 = vmatpush1.bf16.msra.mxu0 0
      %982 = vmatprep.subr.bf16.mxu0 0
      %983 = vmatpush1.bf16.msra.mxu0 0
      %984 = vmatprep.subr.bf16.mxu0 0
      %985 = vmatpush1.bf16.msra.mxu0 0
      %986 = vmatprep.subr.bf16.mxu0 0
      %987 = vmatpush1.bf16.msra.mxu0 0
      %988 = vmatprep.subr.bf16.mxu0 0
      %989 = vmatpush1.bf16.msra.mxu0 0
      %990 = vmatprep.subr.bf16.mxu0 0
      %991 = vmatpush1.bf16.msra.mxu0 0
      %992 = vmatprep.subr.bf16.mxu0 0
      %993 = vmatpush1.bf16.msra.mxu0 0
      %994 = vmatprep.subr.bf16.mxu0 0
      %995 = vmatpush1.bf16.msra.mxu0 0
      %996 = vmatprep.subr.bf16.mxu0 0
      %997 = vmatpush1.bf16.msra.mxu0 0
      %998 = vmatprep.subr.bf16.mxu0 0
      %999 = vmatpush1.bf16.msra.mxu0 0
      %1000 = vmatprep.subr.bf16.mxu0 0
      %1001 = vmatpush1.bf16.msra.mxu0 0
      %1002 = vmatprep.mubr.bf16.mxu0 0
      %1003 = vmatmul.mubr.bf16.gmra.mrb[0].mxu0 %v918
      %v1004 = vpop.f32.mrb[0].mxu0
      %v1005 = vadd.f32 0.0, %v1004
      %v1006 = vpop.f32.mrb[0].mxu0
      %v1007 = vpop.f32.mrb[0].mxu0
      %v1008 = vpop.f32.mrb[0].mxu0
      %1009 = vdwg.mxu0
      %v1010 = vadd.f32 %v885, %v964
      %v1011 = vadd.f32 %v886, %v966
      %v1012 = vadd.f32 %v887, %v1005
      %v1013 = vld [vmem:[%s164] sm:$0x3f]
      %s1014 = scalar_lea.vmem %s1, 28
      %v1015 = vld [vmem:[%s1014] sm:$0xf]
      %v1017 = vcombine.high %v1013, %v1013
      %v1019 = vunpack.c.l.s4 1983009808
      %v1020 = vunpack.c.0.s8 %v1019
      %v1021 = vlaneseq
      %v1022 = vshrl.u32 %v1021, 7
      %v1023 = vsub.s32 %v1020, %v1022
      %v1024 = vrot.slane %v1013, %v1023
      %v1026 = vunpack.c.l.s4 1983009808
      %v1027 = vunpack.c.0.s8 %v1026
      %v1028 = vlaneseq
      %v1029 = vshrl.u32 %v1028, 7
      %v1030 = vsub.s32 %v1027, %v1029
      %v1031 = vrot.slane %v1017, %v1030
      %v1032 = vcombine.high %v1024, %v1024
      %1033 = vrot.lane.b32.xlu0 %v1024, 91
      %v1034 = vpop.permute.xlu0 %1033
      %1035 = vrot.lane.b32.xlu0 %v1032, 91
      %v1036 = vpop.permute.xlu0 %1035
      %1037 = vrot.lane.b32.xlu0 %v1031, 91
      %v1038 = vpop.permute.xlu0 %1037
      %vm1039 = vcmask 744448
      %v1040 = vsel %vm1039, %v1034, %v1036
      %v1041 = vsel %vm1039, %v1036, %v1038
      %v1043 = vsel %vm200, %v1015, 0
      %v1046 = vsel %vm204, %v1040, 0
      %v1049 = vsel %vm204, %v1041, 0
      %v1052 = vsel %vm204, %v1038, 0
      %1054 = vmatprep.subr.bf16.mxu0 %v1049
      %1055 = vmatpush1.bf16.msra.mxu0 %v1046
      %1056 = vmatprep.subr.bf16.mxu0 0
      %1057 = vmatpush1.bf16.msra.mxu0 0
      %1058 = vmatprep.subr.bf16.mxu0 0
      %1059 = vmatpush1.bf16.msra.mxu0 0
      %1060 = vmatprep.subr.bf16.mxu0 0
      %1061 = vmatpush1.bf16.msra.mxu0 0
      %1062 = vmatprep.subr.bf16.mxu0 0
      %1063 = vmatpush1.bf16.msra.mxu0 0
      %1064 = vmatprep.subr.bf16.mxu0 0
      %1065 = vmatpush1.bf16.msra.mxu0 0
      %1066 = vmatprep.subr.bf16.mxu0 0
      %1067 = vmatpush1.bf16.msra.mxu0 0
      %1068 = vmatprep.subr.bf16.mxu0 0
      %1069 = vmatpush1.bf16.msra.mxu0 0
      %1070 = vmatprep.subr.bf16.mxu0 0
      %1071 = vmatpush1.bf16.msra.mxu0 0
      %1072 = vmatprep.subr.bf16.mxu0 0
      %1073 = vmatpush1.bf16.msra.mxu0 0
      %1074 = vmatprep.subr.bf16.mxu0 0
      %1075 = vmatpush1.bf16.msra.mxu0 0
      %1076 = vmatprep.subr.bf16.mxu0 0
      %1077 = vmatpush1.bf16.msra.mxu0 0
      %1078 = vmatprep.subr.bf16.mxu0 0
      %1079 = vmatpush1.bf16.msra.mxu0 0
      %1080 = vmatprep.subr.bf16.mxu0 0
      %1081 = vmatpush1.bf16.msra.mxu0 0
      %1082 = vmatprep.subr.bf16.mxu0 0
      %1083 = vmatpush1.bf16.msra.mxu0 0
      %1084 = vmatprep.subr.bf16.mxu0 0
      %1085 = vmatpush1.bf16.msra.mxu0 0
      %1086 = vmatprep.mubr.bf16.mxu0 0
      %1087 = vmatmul.mubr.bf16.gmra.mrb[0].mxu0 %v1043
      %v1088 = vpop.f32.mrb[0].mxu0
      %v1089 = vadd.f32 0.0, %v1088
      %v1090 = vpop.f32.mrb[0].mxu0
      %v1091 = vadd.f32 0.0, %v1090
      %v1092 = vpop.f32.mrb[0].mxu0
      %v1093 = vpop.f32.mrb[0].mxu0
      %1094 = vdwg.mxu0
      %1095 = vmatprep.subr.bf16.mxu0 0
      %1096 = vmatpush1.bf16.msra.mxu0 %v1052
      %1097 = vmatprep.subr.bf16.mxu0 0
      %1098 = vmatpush1.bf16.msra.mxu0 0
      %1099 = vmatprep.subr.bf16.mxu0 0
      %1100 = vmatpush1.bf16.msra.mxu0 0
      %1101 = vmatprep.subr.bf16.mxu0 0
      %1102 = vmatpush1.bf16.msra.mxu0 0
      %1103 = vmatprep.subr.bf16.mxu0 0
      %1104 = vmatpush1.bf16.msra.mxu0 0
      %1105 = vmatprep.subr.bf16.mxu0 0
      %1106 = vmatpush1.bf16.msra.mxu0 0
      %1107 = vmatprep.subr.bf16.mxu0 0
      %1108 = vmatpush1.bf16.msra.mxu0 0
      %1109 = vmatprep.subr.bf16.mxu0 0
      %1110 = vmatpush1.bf16.msra.mxu0 0
      %1111 = vmatprep.subr.bf16.mxu0 0
      %1112 = vmatpush1.bf16.msra.mxu0 0
      %1113 = vmatprep.subr.bf16.mxu0 0
      %1114 = vmatpush1.bf16.msra.mxu0 0
      %1115 = vmatprep.subr.bf16.mxu0 0
      %1116 = vmatpush1.bf16.msra.mxu0 0
      %1117 = vmatprep.subr.bf16.mxu0 0
      %1118 = vmatpush1.bf16.msra.mxu0 0
      %1119 = vmatprep.subr.bf16.mxu0 0
      %1120 = vmatpush1.bf16.msra.mxu0 0
      %1121 = vmatprep.subr.bf16.mxu0 0
      %1122 = vmatpush1.bf16.msra.mxu0 0
      %1123 = vmatprep.subr.bf16.mxu0 0
      %1124 = vmatpush1.bf16.msra.mxu0 0
      %1125 = vmatprep.subr.bf16.mxu0 0
      %1126 = vmatpush1.bf16.msra.mxu0 0
      %1127 = vmatprep.mubr.bf16.mxu0 0
      %1128 = vmatmul.mubr.bf16.gmra.mrb[0].mxu0 %v1043
      %v1129 = vpop.f32.mrb[0].mxu0
      %v1130 = vadd.f32 0.0, %v1129
      %v1131 = vpop.f32.mrb[0].mxu0
      %v1132 = vpop.f32.mrb[0].mxu0
      %v1133 = vpop.f32.mrb[0].mxu0
      %1134 = vdwg.mxu0
      %v1135 = vadd.f32 %v1010, %v1089
      %v1136 = vadd.f32 %v1011, %v1091
      %v1137 = vadd.f32 %v1012, %v1130
      %v1138 = vld [vmem:[%s164] sm:$0x3f]
      %s1139 = scalar_lea.vmem %s1, 32
      %v1140 = vld [vmem:[%s1139] sm:$0xf]
      %v1142 = vcombine.high %v1138, %v1138
      %v1144 = vunpack.c.l.s4 1983009808
      %v1145 = vunpack.c.0.s8 %v1144
      %v1146 = vlaneseq
      %v1147 = vshrl.u32 %v1146, 7
      %v1148 = vsub.s32 %v1145, %v1147
      %v1149 = vrot.slane %v1138, %v1148
      %v1151 = vunpack.c.l.s4 1983009808
      %v1152 = vunpack.c.0.s8 %v1151
      %v1153 = vlaneseq
      %v1154 = vshrl.u32 %v1153, 7
      %v1155 = vsub.s32 %v1152, %v1154
      %v1156 = vrot.slane %v1142, %v1155
      %v1157 = vcombine.high %v1149, %v1149
      %1158 = vrot.lane.b32.xlu0 %v1149, 90
      %v1159 = vpop.permute.xlu0 %1158
      %1160 = vrot.lane.b32.xlu0 %v1157, 90
      %v1161 = vpop.permute.xlu0 %1160
      %1162 = vrot.lane.b32.xlu0 %v1156, 90
      %v1163 = vpop.permute.xlu0 %1162
      %vm1164 = vcmask 736256
      %v1165 = vsel %vm1164, %v1159, %v1161
      %v1166 = vsel %vm1164, %v1161, %v1163
      %v1168 = vsel %vm200, %v1140, 0
      %v1171 = vsel %vm204, %v1165, 0
      %v1174 = vsel %vm204, %v1166, 0
      %v1177 = vsel %vm204, %v1163, 0
      %1179 = vmatprep.subr.bf16.mxu0 %v1174
      %1180 = vmatpush1.bf16.msra.mxu0 %v1171
      %1181 = vmatprep.subr.bf16.mxu0 0
      %1182 = vmatpush1.bf16.msra.mxu0 0
      %1183 = vmatprep.subr.bf16.mxu0 0
      %1184 = vmatpush1.bf16.msra.mxu0 0
      %1185 = vmatprep.subr.bf16.mxu0 0
      %1186 = vmatpush1.bf16.msra.mxu0 0
      %1187 = vmatprep.subr.bf16.mxu0 0
      %1188 = vmatpush1.bf16.msra.mxu0 0
      %1189 = vmatprep.subr.bf16.mxu0 0
      %1190 = vmatpush1.bf16.msra.mxu0 0
      %1191 = vmatprep.subr.bf16.mxu0 0
      %1192 = vmatpush1.bf16.msra.mxu0 0
      %1193 = vmatprep.subr.bf16.mxu0 0
      %1194 = vmatpush1.bf16.msra.mxu0 0
      %1195 = vmatprep.subr.bf16.mxu0 0
      %1196 = vmatpush1.bf16.msra.mxu0 0
      %1197 = vmatprep.subr.bf16.mxu0 0
      %1198 = vmatpush1.bf16.msra.mxu0 0
      %1199 = vmatprep.subr.bf16.mxu0 0
      %1200 = vmatpush1.bf16.msra.mxu0 0
      %1201 = vmatprep.subr.bf16.mxu0 0
      %1202 = vmatpush1.bf16.msra.mxu0 0
      %1203 = vmatprep.subr.bf16.mxu0 0
      %1204 = vmatpush1.bf16.msra.mxu0 0
      %1205 = vmatprep.subr.bf16.mxu0 0
      %1206 = vmatpush1.bf16.msra.mxu0 0
      %1207 = vmatprep.subr.bf16.mxu0 0
      %1208 = vmatpush1.bf16.msra.mxu0 0
      %1209 = vmatprep.subr.bf16.mxu0 0
      %1210 = vmatpush1.bf16.msra.mxu0 0
      %1211 = vmatprep.mubr.bf16.mxu0 0
      %1212 = vmatmul.mubr.bf16.gmra.mrb[0].mxu0 %v1168
      %v1213 = vpop.f32.mrb[0].mxu0
      %v1214 = vadd.f32 0.0, %v1213
      %v1215 = vpop.f32.mrb[0].mxu0
      %v1216 = vadd.f32 0.0, %v1215
      %v1217 = vpop.f32.mrb[0].mxu0
      %v1218 = vpop.f32.mrb[0].mxu0
      %1219 = vdwg.mxu0
      %1220 = vmatprep.subr.bf16.mxu0 0
      %1221 = vmatpush1.bf16.msra.mxu0 %v1177
      %1222 = vmatprep.subr.bf16.mxu0 0
      %1223 = vmatpush1.bf16.msra.mxu0 0
      %1224 = vmatprep.subr.bf16.mxu0 0
      %1225 = vmatpush1.bf16.msra.mxu0 0
      %1226 = vmatprep.subr.bf16.mxu0 0
      %1227 = vmatpush1.bf16.msra.mxu0 0
      %1228 = vmatprep.subr.bf16.mxu0 0
      %1229 = vmatpush1.bf16.msra.mxu0 0
      %1230 = vmatprep.subr.bf16.mxu0 0
      %1231 = vmatpush1.bf16.msra.mxu0 0
      %1232 = vmatprep.subr.bf16.mxu0 0
      %1233 = vmatpush1.bf16.msra.mxu0 0
      %1234 = vmatprep.subr.bf16.mxu0 0
      %1235 = vmatpush1.bf16.msra.mxu0 0
      %1236 = vmatprep.subr.bf16.mxu0 0
      %1237 = vmatpush1.bf16.msra.mxu0 0
      %1238 = vmatprep.subr.bf16.mxu0 0
      %1239 = vmatpush1.bf16.msra.mxu0 0
      %1240 = vmatprep.subr.bf16.mxu0 0
      %1241 = vmatpush1.bf16.msra.mxu0 0
      %1242 = vmatprep.subr.bf16.mxu0 0
      %1243 = vmatpush1.bf16.msra.mxu0 0
      %1244 = vmatprep.subr.bf16.mxu0 0
      %1245 = vmatpush1.bf16.msra.mxu0 0
      %1246 = vmatprep.subr.bf16.mxu0 0
      %1247 = vmatpush1.bf16.msra.mxu0 0
      %1248 = vmatprep.subr.bf16.mxu0 0
      %1249 = vmatpush1.bf16.msra.mxu0 0
      %1250 = vmatprep.subr.bf16.mxu0 0
      %1251 = vmatpush1.bf16.msra.mxu0 0
      %1252 = vmatprep.mubr.bf16.mxu0 0
      %1253 = vmatmul.mubr.bf16.gmra.mrb[0].mxu0 %v1168
      %v1254 = vpop.f32.mrb[0].mxu0
      %v1255 = vadd.f32 0.0, %v1254
      %v1256 = vpop.f32.mrb[0].mxu0
      %v1257 = vpop.f32.mrb[0].mxu0
      %v1258 = vpop.f32.mrb[0].mxu0
      %1259 = vdwg.mxu0
      %v1260 = vadd.f32 %v1135, %v1214
      %v1261 = vadd.f32 %v1136, %v1216
      %v1262 = vadd.f32 %v1137, %v1255
      %v1263 = vld [vmem:[%s2] sm:$0x7]
      %v1265 = vlaneseq
      %v1266 = vshrl.u32 %v1265, 7
      %v1267 = vsub.s32 0, %v1266
      %v1268 = vrot.slane %v1263, %v1267
      %v1269 = vlaneseq
      %v1270 = vshrl.u32 %v1269, 7
      %v1271 = vsub.s32 1, %v1270
      %v1272 = vrot.slane %v1263, %v1271
      %v1273 = vlaneseq
      %v1274 = vshrl.u32 %v1273, 7
      %v1275 = vsub.s32 2, %v1274
      %v1276 = vrot.slane %v1263, %v1275
      %v1280 = vmul.f32 %v1260, %v1268
      %v1281 = vmul.f32 %v1261, %v1272
      %v1282 = vmul.f32 %v1262, %v1276
      %v1283 = vadd.f32 %v1280, %v1281
      %vm1284 = vcmask 261120
      %v1285 = vsel %vm1284, %v1282, 0.0
      %v1286 = vadd.f32 %v1283, %v1285
      %1287 = vadd.xlane.f32.xlu0 %v1286
      %v1288 = vpop.xlane.xlu0 %1287
      %vm1289 = vcmask 7168
      %1290 = vst.msk [vmem:[%s168] sm:$0xff] %vm1289, %v1288
      %v1291 = vmul.f32 %v1280, %v1280
      %v1292 = vmul.f32 %v1281, %v1281
      %v1293 = vmul.f32 %v1282, %v1282
      %v1294 = vadd.f32 %v1291, %v1292
      %v1295 = vsel %vm1284, %v1293, 0.0
      %v1296 = vadd.f32 %v1294, %v1295
      %1297 = vadd.xlane.f32.xlu0 %v1296
      %v1298 = vpop.xlane.xlu0 %1297
      %vm1299 = vcmask 15368
      %1300 = vst.msk [vmem:[%s168] sm:$0xff] %vm1299, %v1298
      %p1301 = scmp.lt.s32.totalorder %s14, 1
      %s1302 = scalar_select %p1301, %s14, 1
      %s1303 = smul.addr %s1302, 8
      %s1304 = scalar_lea.vmem %s3, %s1303
      // Predicated region
      $region33: #{unit_forward.2} parent=31 // pred_check
        %p1305 = pneg %p100
      $region34: #{unit_forward.2} parent=31 // pred_check_branch
        %1307 = sbr.rel (%p1305) target = $region36
      $region35: #{unit_forward.2} parent=31 // pred_region
        _
      $region36: #{unit_forward.2} parent=31 // pred_fallthru
        _
    $region32: #{unit_forward.2} parent=5 // pred_fallthru
      _
    %p1308 = scmp.le.s32.totalorder 2, %s9
    // Predicated region
    $region37: #{unit_forward.2} parent=5 // pred_check
      %p1309 = pneg %p1308
    $region38: #{unit_forward.2} parent=5 // pred_check_branch
      %1311 = sbr.rel (%p1309) target = $region40
    $region39: #{unit_forward.2} parent=5 // pred_region
      %s1312 = ssub.s32 %s9, 2
      // Predicated region
      $region41: #{unit_forward.2} parent=39 // pred_check
        %p1313 = pneg %p106
      $region42: #{unit_forward.2} parent=39 // pred_check_branch
        %1315 = sbr.rel (%p1313) target = $region44
      $region43: #{unit_forward.2} parent=39 // pred_region
        %p1316 = scmp.lt.s32.totalorder %s15, 1
        %s1317 = scalar_select %p1316, %s15, 1
        %s1318 = smul.addr %s1317, 8
        %s1319 = scalar_lea.vmem %s3, %s1318
      $region44: #{unit_forward.2} parent=39 // pred_fallthru
        _
    $region40: #{unit_forward.2} parent=5 // pred_fallthru
      _
  $region6: #{unit_forward.2} parent=0 // loop_footer
    %s13 = sadd.s32 1, %s9
  $region7: #{unit_forward.2} parent=0 // loop_footer_branch
    %8 = sbr.rel target = $region3
  $region8: #{unit_forward.2} parent=0 // loop_exit
    _

</llo_original>
